<compile_context>
chip_gen: v5e
topology: v5e:2x2
jax: 0.10.0
libtpu: 0.0.40
codegen_flags: <defaults>
</compile_context>

<pallas_src>
import functools

import jax
import jax.numpy as jnp
from jax.experimental import pallas as pl
from jax.experimental.pallas import tpu as pltpu

_LN_EPS = 1e-5  # PyTorch LayerNorm default
_MB = 1024 * 1024


def _round_up(x, m):
    return (x + m - 1) // m * m


def _row_tiling(m, target=256):
    """Pick a row-tile size (multiple of 16 for bf16 sublane packing) and padded row count."""
    mp = _round_up(m, 16)
    if mp <= target:
        return mp, mp
    return target, _round_up(m, target)


def _cparams(vmem_bytes):
    return pltpu.CompilerParams(
        dimension_semantics=("parallel",),
        vmem_limit_bytes=int(min(max(vmem_bytes, 16 * _MB), 64 * _MB)),
    )


# ---------------------------------------------------------------------------
# In-kernel helpers
# ---------------------------------------------------------------------------

def _layernorm_f32(x, gamma, beta):
    mu = jnp.mean(x, axis=-1, keepdims=True)
    xc = x - mu
    var = jnp.mean(xc * xc, axis=-1, keepdims=True)
    return xc * jax.lax.rsqrt(var + _LN_EPS) * gamma + beta


# ---------------------------------------------------------------------------
# Pallas kernels
# ---------------------------------------------------------------------------

def _ln_qkv_kernel(x_ref, g_ref, b_ref, w_ref, bias_ref, qkv_ref):
    """qkv = LayerNorm(x) @ W_in + b_in  (bf16 MXU inputs, f32 accumulation).

    W_in's q columns are pre-scaled by hd**-0.5 at init, so no scale is applied in attention.
    """
    xn = _layernorm_f32(x_ref[...], g_ref[...], b_ref[...])
    acc = jnp.dot(xn.astype(jnp.bfloat16), w_ref[...],
                  preferred_element_type=jnp.float32)
    qkv_ref[...] = (acc + bias_ref[...]).astype(qkv_ref.dtype)


def _attn_core(q, k, v, mask, o_ref):
    """One (batch, head): ctx = softmax(q k^T [+ mask]) v.  q/k/v are (L, hd) bf16."""
    s = jax.lax.dot_general(q, k, (((1,), (1,)), ((), ())),
                            preferred_element_type=jnp.float32)      # (L, L) f32
    if mask is not None:
        s = s + mask
    m = jnp.max(s, axis=-1, keepdims=True)
    p = jnp.exp(s - m)
    l = jnp.sum(p, axis=-1, keepdims=True)
    ctx = jnp.dot(p.astype(jnp.bfloat16), v, preferred_element_type=jnp.float32)
    ctx = ctx * pl.reciprocal(jnp.maximum(l, 1e-30), approx=True)    # EUP, not VALU divide
    o_ref[...] = ctx.astype(o_ref.dtype)


def _attn_kernel_nomask(q_ref, k_ref, v_ref, o_ref):
    _attn_core(q_ref[...], k_ref[...], v_ref[...], None, o_ref)


def _attn_kernel_masked(q_ref, k_ref, v_ref, m_ref, o_ref):
    _attn_core(q_ref[...], k_ref[...], v_ref[...], m_ref[...], o_ref)


def _proj_mlp_kernel(ctx_ref, x_ref, wo_ref, bo_ref, g2_ref, bt2_ref,
                     wfc_ref, bfc_ref, wpr_ref, bpr_ref, o_ref):
    """out = x1 + c_proj(QuickGELU(c_fc(LN2(x1))));  x1 = x + out_proj(ctx)."""
    attn_out = jnp.dot(ctx_ref[...], wo_ref[...],
                       preferred_element_type=jnp.float32) + bo_ref[...]
    x1 = x_ref[...] + attn_out
    xn = _layernorm_f32(x1, g2_ref[...], bt2_ref[...])
    h = jnp.dot(xn.astype(jnp.bfloat16), wfc_ref[...],
                preferred_element_type=jnp.float32) + bfc_ref[...]
    h = h * pl.reciprocal(1.0 + jnp.exp(-1.702 * h), approx=True)    # QuickGELU
    mlp_out = jnp.dot(h.astype(jnp.bfloat16), wpr_ref[...],
                      preferred_element_type=jnp.float32) + bpr_ref[...]
    o_ref[...] = x1 + mlp_out


# ---------------------------------------------------------------------------
# Forward wrapper
# ---------------------------------------------------------------------------

def residual_attention_block_forward(params, x, attn_mask=None, *, n_head):
    """x: (L, N, E) float32  ->  (L, N, E) float32."""
    L, N, E = x.shape
    H = n_head
    hd = E // H
    assert H * hd == E
    M = L * N
    B = N * H

    # Batch-major rows (n, l): attention blocks per (batch, head) become contiguous.
    xb = x.transpose(1, 0, 2).reshape(M, E).astype(jnp.float32)

    TILE_M, Mp = _row_tiling(M)
    grid_m = Mp // TILE_M
    xb_p = jnp.pad(xb, ((0, Mp - M), (0, 0))) if Mp != M else xb

    # --- Kernel 1: LN1 + QKV projection (grid over row tiles) --------------
    k1_vmem = (E * 3 * E * 2 + 3 * E * 4 + 2 * E * 4
               + 2 * TILE_M * E * 4 + 2 * TILE_M * 3 * E * 2 + TILE_M * 3 * E * 4
               + 4 * _MB)
    k1_cost = pl.CostEstimate(
        flops=2 * Mp * E * 3 * E,
        transcendentals=Mp,
        bytes_accessed=Mp * E * 4 + E * 3 * E * 2 + Mp * 3 * E * 2)
    qkv = pl.pallas_call(
        _ln_qkv_kernel,
        out_shape=jax.ShapeDtypeStruct((Mp, 3 * E), jnp.bfloat16),
        grid=(grid_m,),
        in_specs=[
            pl.BlockSpec((TILE_M, E), lambda i: (i, 0)),
            pl.BlockSpec((1, E), lambda i: (0, 0)),          # ln1_g  (resident)
            pl.BlockSpec((1, E), lambda i: (0, 0)),          # ln1_b  (resident)
            pl.BlockSpec((E, 3 * E), lambda i: (0, 0)),      # w_in   (resident)
            pl.BlockSpec((1, 3 * E), lambda i: (0, 0)),      # b_in   (resident)
        ],
        out_specs=pl.BlockSpec((TILE_M, 3 * E), lambda i: (i, 0)),
        compiler_params=_cparams(k1_vmem),
        cost_estimate=k1_cost,
    )(xb_p, params['ln1_g'], params['ln1_b'], params['w_in'], params['b_in'])

    # --- Head split (single reshape/transpose; hd < 128 lanes prevents doing
    #     this via column BlockSpecs without violating (8,128) alignment) ----
    qkv_h = (qkv[:M].reshape(N, L, 3, H, hd)
             .transpose(2, 0, 3, 1, 4)
             .reshape(3, B, L, hd))
    qh, kh, vh = qkv_h[0], qkv_h[1], qkv_h[2]

    attn_inputs = [qh, kh, vh]
    attn_specs = [pl.BlockSpec((None, L, hd), lambda b: (b, 0, 0)) for _ in range(3)]
    mask_bytes = 0
    if attn_mask is None:
        kern = _attn_kernel_nomask
    else:
        mask = attn_mask
        if mask.dtype == jnp.bool_:
            mask = jnp.where(mask, jnp.float32(-1e30), jnp.float32(0.0))
        mask = mask.astype(jnp.float32)
        if mask.ndim == 2:
            # single (L, L) block, resident in VMEM and shared by every head
            attn_specs.append(pl.BlockSpec((L, L), lambda b: (0, 0)))
        else:
            mask = jnp.broadcast_to(mask, (B, L, L))
            attn_specs.append(pl.BlockSpec((None, L, L), lambda b: (b, 0, 0)))
        attn_inputs.append(mask)
        mask_bytes = int(mask.size) * 4
        kern = _attn_kernel_masked

    # --- Kernel 2: attention, grid over (batch * heads) --------------------
    k2_vmem = (2 * 3 * L * hd * 2 + 2 * L * hd * 2 + 4 * L * L * 4
               + 2 * L * L * 4 + 4 * _MB)
    k2_cost = pl.CostEstimate(
        flops=4 * B * L * L * hd,
        transcendentals=B * L * L + B * L,
        bytes_accessed=4 * B * L * hd * 2 + mask_bytes)
    ctx = pl.pallas_call(
        kern,
        out_shape=jax.ShapeDtypeStruct((B, L, hd), jnp.bfloat16),
        grid=(B,),
        in_specs=attn_specs,
        out_specs=pl.BlockSpec((None, L, hd), lambda b: (b, 0, 0)),
        compiler_params=_cparams(k2_vmem),
        cost_estimate=k2_cost,
    )(*attn_inputs)

    # --- Head merge back into (M, E) rows -----------------------------------
    ctx_m = ctx.reshape(N, H, L, hd).transpose(0, 2, 1, 3).reshape(M, E)
    ctx_p = jnp.pad(ctx_m, ((0, Mp - M), (0, 0))) if Mp != M else ctx_m

    # --- Kernel 3: out_proj + residual + LN2 + MLP + residual ---------------
    # Note: at very large d_model (E >= ~1280) on v7x's 64 MiB VMEM, split this kernel
    # into (out_proj+residual+LN2) and (MLP), or tile the 4E hidden dim with an accumulator.
    w_bytes = (E * E + E * 4 * E + 4 * E * E) * 2 + (3 * E + 4 * E) * 4 + 4 * E * 4
    k3_vmem = (w_bytes
               + 2 * TILE_M * E * 2 + 2 * TILE_M * E * 4 + 2 * TILE_M * E * 4
               + 2 * TILE_M * 4 * E * 4
               + 4 * _MB)
    k3_cost = pl.CostEstimate(
        flops=2 * Mp * E * E + 4 * Mp * E * 4 * E,
        transcendentals=Mp * 4 * E + Mp,
        bytes_accessed=Mp * E * 2 + 2 * Mp * E * 4 + w_bytes + Mp * E * 4)
    out = pl.pallas_call(
        _proj_mlp_kernel,
        out_shape=jax.ShapeDtypeStruct((Mp, E), jnp.float32),
        grid=(grid_m,),
        in_specs=[
            pl.BlockSpec((TILE_M, E), lambda i: (i, 0)),     # ctx
            pl.BlockSpec((TILE_M, E), lambda i: (i, 0)),     # residual x
            pl.BlockSpec((E, E), lambda i: (0, 0)),          # w_out  (resident)
            pl.BlockSpec((1, E), lambda i: (0, 0)),          # b_out
            pl.BlockSpec((1, E), lambda i: (0, 0)),          # ln2_g
            pl.BlockSpec((1, E), lambda i: (0, 0)),          # ln2_b
            pl.BlockSpec((E, 4 * E), lambda i: (0, 0)),      # w_fc   (resident)
            pl.BlockSpec((1, 4 * E), lambda i: (0, 0)),      # b_fc
            pl.BlockSpec((4 * E, E), lambda i: (0, 0)),      # w_proj (resident)
            pl.BlockSpec((1, E), lambda i: (0, 0)),          # b_proj
        ],
        out_specs=pl.BlockSpec((TILE_M, E), lambda i: (i, 0)),
        compiler_params=_cparams(k3_vmem),
        cost_estimate=k3_cost,
    )(ctx_p, xb_p, params['w_out'], params['b_out'],
      params['ln2_g'], params['ln2_b'],
      params['w_fc'], params['b_fc'],
      params['w_proj'], params['b_proj'])

    out = out[:M].reshape(N, L, E).transpose(1, 0, 2)
    return out.astype(x.dtype)


# ---------------------------------------------------------------------------
# Parameter init (deterministic; PyTorch layouts kept for the reference path,
# transposed + bf16-cast once at init for the kernel path; hd**-0.5 folded
# into the q slice of the in-projection)
# ---------------------------------------------------------------------------

def init_params(key, d_model, n_head):
    E = d_model
    hd = E // n_head
    scale = float(hd) ** -0.5
    ks = jax.random.split(key, 4)

    def lin(k, fan_in, fan_out):
        w = 0.02 * jax.random.normal(k, (fan_out, fan_in), jnp.float32)   # torch (out, in)
        b = 0.02 * jax.random.normal(jax.random.fold_in(k, 1), (fan_out,), jnp.float32)
        return w, b

    in_w, in_b = lin(ks[0], E, 3 * E)       # nn.MultiheadAttention in_proj
    out_w, out_b = lin(ks[1], E, E)         # out_proj
    fc_w, fc_b = lin(ks[2], E, 4 * E)       # mlp.c_fc
    pr_w, pr_b = lin(ks[3], 4 * E, E)       # mlp.c_proj

    ln1_g = jnp.ones((E,), jnp.float32)
    ln1_b = jnp.zeros((E,), jnp.float32)
    ln2_g = jnp.ones((E,), jnp.float32)
    ln2_b = jnp.zeros((E,), jnp.float32)

    ref_params = dict(in_proj_w=in_w, in_proj_b=in_b,
                      out_proj_w=out_w, out_proj_b=out_b,
                      c_fc_w=fc_w, c_fc_b=fc_b,
                      c_proj_w=pr_w, c_proj_b=pr_b,
                      ln1_g=ln1_g, ln1_b=ln1_b, ln2_g=ln2_g, ln2_b=ln2_b)

    # Fold the attention scale into the q output columns of the fused QKV projection.
    col_scale = jnp.concatenate([jnp.full((E,), scale, jnp.float32),
                                 jnp.ones((2 * E,), jnp.float32)])
    kernel_params = dict(
        w_in=(in_w.T * col_scale).astype(jnp.bfloat16),
        b_in=(in_b * col_scale).reshape(1, -1),
        w_out=out_w.T.astype(jnp.bfloat16), b_out=out_b.reshape(1, -1),
        w_fc=fc_w.T.astype(jnp.bfloat16),   b_fc=fc_b.reshape(1, -1),
        w_proj=pr_w.T.astype(jnp.bfloat16), b_proj=pr_b.reshape(1, -1),
        ln1_g=ln1_g.reshape(1, -1), ln1_b=ln1_b.reshape(1, -1),
        ln2_g=ln2_g.reshape(1, -1), ln2_b=ln2_b.reshape(1, -1),
    )
    return kernel_params, ref_params


# ---------------------------------------------------------------------------
# Pure-JAX f32 reference (mirrors the PyTorch module exactly)
# ---------------------------------------------------------------------------

def reference_forward(p, x, n_head, attn_mask=None):
    L, N, E = x.shape
    H = n_head
    hd = E // H

    def ln(t, g, b):
        mu = t.mean(-1, keepdims=True)
        var = ((t - mu) ** 2).mean(-1, keepdims=True)
        return (t - mu) / jnp.sqrt(var + _LN_EPS) * g + b

    xt = x.reshape(L * N, E)
    xn = ln(xt, p['ln1_g'], p['ln1_b'])
    qkv = xn @ p['in_proj_w'].T + p['in_proj_b']
    q, k, v = jnp.split(qkv, 3, axis=-1)

    def to_heads(t):
        return t.reshape(L, N * H, hd).transpose(1, 0, 2)

    q, k, v = to_heads(q), to_heads(k), to_heads(v)
    s = jnp.einsum('bqd,bkd->bqk', q, k) * (float(hd) ** -0.5)
    if attn_mask is not None:
        s = s + attn_mask
    ctx = jnp.einsum('bqk,bkd->bqd', jax.nn.softmax(s, axis=-1), v)
    ctx = ctx.transpose(1, 0, 2).reshape(L * N, E)
    x1 = xt + ctx @ p['out_proj_w'].T + p['out_proj_b']

    xn2 = ln(x1, p['ln2_g'], p['ln2_b'])
    h = xn2 @ p['c_fc_w'].T + p['c_fc_b']
    h = h * jax.nn.sigmoid(1.702 * h)
    out = x1 + h @ p['c_proj_w'].T + p['c_proj_b']
    return out.reshape(L, N, E)


# ---------------------------------------------------------------------------

if __name__ == "__main__":
    L, N, E, H = 8, 2, 128, 4          # seq, batch, d_model, n_head

    root = jax.random.PRNGKey(0)
    kp, kx = jax.random.split(root)
    kernel_params, ref_params = init_params(kp, E, H)
    x = jax.random.normal(kx, (L, N, E), jnp.float32)

    fwd = jax.jit(functools.partial(residual_attention_block_forward, n_head=H))

    # Case 1: attn_mask=None (module default constructor case)
    out = fwd(kernel_params, x)
    jax.block_until_ready(out)
    ref = reference_forward(ref_params, x, H)
    err = float(jnp.max(jnp.abs(out - ref)))
    assert out.shape == (L, N, E)
    assert err < 5e-2, f"no-mask max abs err vs f32 reference: {err}"

    # Case 2: additive causal mask (exercises the masked kernel variant)
    row = jnp.arange(L)
    causal = jnp.where(row[None, :] > row[:, None],
                       jnp.float32(-jnp.inf), jnp.float32(0.0))
    out_m = fwd(kernel_params, x, causal)
    jax.block_until_ready(out_m)
    ref_m = reference_forward(ref_params, x, H, attn_mask=causal)
    err_m = float(jnp.max(jnp.abs(out_m - ref_m)))
    assert err_m < 5e-2, f"masked max abs err vs f32 reference: {err_m}"

    print("KERNEL_OK")
</pallas_src>

<mosaic_0001>
module attributes {stable_mosaic.version = 11 : i64} {
  func.func @_ln_qkv_kernel(%arg0: i32, %arg1: memref<16x128xf32, #tpu.memory_space<vmem>>, %arg2: memref<1x128xf32, #tpu.memory_space<vmem>>, %arg3: memref<1x128xf32, #tpu.memory_space<vmem>>, %arg4: memref<128x384xbf16, #tpu.memory_space<vmem>>, %arg5: memref<1x384xf32, #tpu.memory_space<vmem>>, %arg6: memref<16x384xbf16, #tpu.memory_space<vmem>>) attributes {dimension_semantics = [#tpu.dimension_semantics<parallel>], iteration_bounds = array<i64: 1>, scalar_prefetch = 0 : i64, scratch_operands = 0 : i64, tpu.core_type = #tpu.core_type<tc>, window_params = [{transform_indices = @transform_0, window_bounds = array<i64: 16, 128>}, {pipeline_mode = #tpu.pipeline_mode<synchronous>, transform_indices = @transform_1, window_bounds = array<i64: 1, 128>}, {pipeline_mode = #tpu.pipeline_mode<synchronous>, transform_indices = @transform_2, window_bounds = array<i64: 1, 128>}, {pipeline_mode = #tpu.pipeline_mode<synchronous>, transform_indices = @transform_3, window_bounds = array<i64: 128, 384>}, {pipeline_mode = #tpu.pipeline_mode<synchronous>, transform_indices = @transform_4, window_bounds = array<i64: 1, 384>}, {transform_indices = @transform_5, window_bounds = array<i64: 16, 384>}]} {
    %c0 = arith.constant 0 : index
    %c0_0 = arith.constant 0 : index
    %0 = vector.load %arg1[%c0, %c0_0] : memref<16x128xf32, #tpu.memory_space<vmem>>, vector<16x128xf32>
    %c0_1 = arith.constant 0 : index
    %c0_2 = arith.constant 0 : index
    %1 = vector.load %arg2[%c0_1, %c0_2] : memref<1x128xf32, #tpu.memory_space<vmem>>, vector<1x128xf32>
    %c0_3 = arith.constant 0 : index
    %c0_4 = arith.constant 0 : index
    %2 = vector.load %arg3[%c0_3, %c0_4] : memref<1x128xf32, #tpu.memory_space<vmem>>, vector<1x128xf32>
    %cst = arith.constant dense<0.000000e+00> : vector<16xf32>
    %3 = vector.multi_reduction <add>, %0, %cst [1] : vector<16x128xf32> to vector<16xf32>
    %4 = vector.shape_cast %3 : vector<16xf32> to vector<16x1xf32>
    %cst_5 = arith.constant 1.280000e+02 : f32
    %5 = vector.broadcast %cst_5 : f32 to vector<16x1xf32>
    %6 = arith.divf %4, %5 : vector<16x1xf32>
    %7 = vector.broadcast %6 : vector<16x1xf32> to vector<16x128xf32>
    %8 = arith.subf %0, %7 : vector<16x128xf32>
    %9 = arith.mulf %8, %8 : vector<16x128xf32>
    %cst_6 = arith.constant dense<0.000000e+00> : vector<16xf32>
    %10 = vector.multi_reduction <add>, %9, %cst_6 [1] : vector<16x128xf32> to vector<16xf32>
    %11 = vector.shape_cast %10 : vector<16xf32> to vector<16x1xf32>
    %cst_7 = arith.constant 1.280000e+02 : f32
    %12 = vector.broadcast %cst_7 : f32 to vector<16x1xf32>
    %13 = arith.divf %11, %12 : vector<16x1xf32>
    %cst_8 = arith.constant 9.99999974E-6 : f32
    %14 = vector.broadcast %cst_8 : f32 to vector<16x1xf32>
    %15 = arith.addf %13, %14 : vector<16x1xf32>
    %16 = math.rsqrt %15 : vector<16x1xf32>
    %17 = vector.broadcast %16 : vector<16x1xf32> to vector<16x128xf32>
    %18 = arith.mulf %8, %17 : vector<16x128xf32>
    %19 = vector.broadcast %1 : vector<1x128xf32> to vector<16x128xf32>
    %20 = arith.mulf %18, %19 : vector<16x128xf32>
    %21 = vector.broadcast %2 : vector<1x128xf32> to vector<16x128xf32>
    %22 = arith.addf %20, %21 : vector<16x128xf32>
    %23 = arith.truncf %22 : vector<16x128xf32> to vector<16x128xbf16>
    %c0_9 = arith.constant 0 : index
    %c0_10 = arith.constant 0 : index
    %24 = vector.load %arg4[%c0_9, %c0_10] : memref<128x384xbf16, #tpu.memory_space<vmem>>, vector<128x384xbf16>
    %cst_11 = arith.constant dense<0.000000e+00> : vector<16x384xf32>
    %25 = tpu.matmul %23, %24, %cst_11 {dimension_numbers = #tpu.dot_dimension_numbers<[1], [0], [0], [1], [0, 0, 1, 1], [], []>} : vector<16x128xbf16>, vector<128x384xbf16>, vector<16x384xf32> -> vector<16x384xf32>
    %c0_12 = arith.constant 0 : index
    %c0_13 = arith.constant 0 : index
    %26 = vector.load %arg5[%c0_12, %c0_13] : memref<1x384xf32, #tpu.memory_space<vmem>>, vector<1x384xf32>
    %27 = vector.broadcast %26 : vector<1x384xf32> to vector<16x384xf32>
    %28 = arith.addf %25, %27 : vector<16x384xf32>
    %29 = arith.truncf %28 : vector<16x384xf32> to vector<16x384xbf16>
    %c0_14 = arith.constant 0 : index
    %c0_15 = arith.constant 0 : index
    %30 = vector.load %arg6[%c0_14, %c0_15] : memref<16x384xbf16, #tpu.memory_space<vmem>>, vector<16x384xbf16>
    tpu.vector_store %arg6[%c0_14, %c0_15], %29 {strides = array<i32>} : memref<16x384xbf16, #tpu.memory_space<vmem>>, vector<16x384xbf16>,
    return
  }
  func.func @transform_0(%arg0: i32) -> (i32, i32) {
    %c0_i32 = arith.constant 0 : i32
    %c0_i32_0 = arith.constant 0 : i32
    return %arg0, %c0_i32 : i32, i32
  }
  func.func @transform_1(%arg0: i32) -> (i32, i32) {
    %c0_i32 = arith.constant 0 : i32
    %c0_i32_0 = arith.constant 0 : i32
    %c0_i32_1 = arith.constant 0 : i32
    return %c0_i32, %c0_i32_0 : i32, i32
  }
  func.func @transform_2(%arg0: i32) -> (i32, i32) {
    %c0_i32 = arith.constant 0 : i32
    %c0_i32_0 = arith.constant 0 : i32
    %c0_i32_1 = arith.constant 0 : i32
    return %c0_i32, %c0_i32_0 : i32, i32
  }
  func.func @transform_3(%arg0: i32) -> (i32, i32) {
    %c0_i32 = arith.constant 0 : i32
    %c0_i32_0 = arith.constant 0 : i32
    %c0_i32_1 = arith.constant 0 : i32
    return %c0_i32, %c0_i32_0 : i32, i32
  }
  func.func @transform_4(%arg0: i32) -> (i32, i32) {
    %c0_i32 = arith.constant 0 : i32
    %c0_i32_0 = arith.constant 0 : i32
    %c0_i32_1 = arith.constant 0 : i32
    return %c0_i32, %c0_i32_0 : i32, i32
  }
  func.func @transform_5(%arg0: i32) -> (i32, i32) {
    %c0_i32 = arith.constant 0 : i32
    %c0_i32_0 = arith.constant 0 : i32
    return %arg0, %c0_i32 : i32, i32
  }
}

module attributes {stable_mosaic.version = 11 : i64} {
  func.func @_proj_mlp_kernel(%arg0: i32, %arg1: memref<16x128xbf16, #tpu.memory_space<vmem>>, %arg2: memref<16x128xf32, #tpu.memory_space<vmem>>, %arg3: memref<128x128xbf16, #tpu.memory_space<vmem>>, %arg4: memref<1x128xf32, #tpu.memory_space<vmem>>, %arg5: memref<1x128xf32, #tpu.memory_space<vmem>>, %arg6: memref<1x128xf32, #tpu.memory_space<vmem>>, %arg7: memref<128x512xbf16, #tpu.memory_space<vmem>>, %arg8: memref<1x512xf32, #tpu.memory_space<vmem>>, %arg9: memref<512x128xbf16, #tpu.memory_space<vmem>>, %arg10: memref<1x128xf32, #tpu.memory_space<vmem>>, %arg11: memref<16x128xf32, #tpu.memory_space<vmem>>) attributes {dimension_semantics = [#tpu.dimension_semantics<parallel>], iteration_bounds = array<i64: 1>, scalar_prefetch = 0 : i64, scratch_operands = 0 : i64, tpu.core_type = #tpu.core_type<tc>, window_params = [{transform_indices = @transform_0, window_bounds = array<i64: 16, 128>}, {transform_indices = @transform_1, window_bounds = array<i64: 16, 128>}, {pipeline_mode = #tpu.pipeline_mode<synchronous>, transform_indices = @transform_2, window_bounds = array<i64: 128, 128>}, {pipeline_mode = #tpu.pipeline_mode<synchronous>, transform_indices = @transform_3, window_bounds = array<i64: 1, 128>}, {pipeline_mode = #tpu.pipeline_mode<synchronous>, transform_indices = @transform_4, window_bounds = array<i64: 1, 128>}, {pipeline_mode = #tpu.pipeline_mode<synchronous>, transform_indices = @transform_5, window_bounds = array<i64: 1, 128>}, {pipeline_mode = #tpu.pipeline_mode<synchronous>, transform_indices = @transform_6, window_bounds = array<i64: 128, 512>}, {pipeline_mode = #tpu.pipeline_mode<synchronous>, transform_indices = @transform_7, window_bounds = array<i64: 1, 512>}, {pipeline_mode = #tpu.pipeline_mode<synchronous>, transform_indices = @transform_8, window_bounds = array<i64: 512, 128>}, {pipeline_mode = #tpu.pipeline_mode<synchronous>, transform_indices = @transform_9, window_bounds = array<i64: 1, 128>}, {transform_indices = @transform_10, window_bounds = array<i64: 16, 128>}]} {
    %c0 = arith.constant 0 : index
    %c0_0 = arith.constant 0 : index
    %0 = vector.load %arg1[%c0, %c0_0] : memref<16x128xbf16, #tpu.memory_space<vmem>>, vector<16x128xbf16>
    %c0_1 = arith.constant 0 : index
    %c0_2 = arith.constant 0 : index
    %1 = vector.load %arg3[%c0_1, %c0_2] : memref<128x128xbf16, #tpu.memory_space<vmem>>, vector<128x128xbf16>
    %cst = arith.constant dense<0.000000e+00> : vector<16x128xf32>
    %2 = tpu.matmul %0, %1, %cst {dimension_numbers = #tpu.dot_dimension_numbers<[1], [0], [0], [1], [0, 0, 1, 1], [], []>} : vector<16x128xbf16>, vector<128x128xbf16>, vector<16x128xf32> -> vector<16x128xf32>
    %c0_3 = arith.constant 0 : index
    %c0_4 = arith.constant 0 : index
    %3 = vector.load %arg4[%c0_3, %c0_4] : memref<1x128xf32, #tpu.memory_space<vmem>>, vector<1x128xf32>
    %4 = vector.broadcast %3 : vector<1x128xf32> to vector<16x128xf32>
    %5 = arith.addf %2, %4 : vector<16x128xf32>
    %c0_5 = arith.constant 0 : index
    %c0_6 = arith.constant 0 : index
    %6 = vector.load %arg2[%c0_5, %c0_6] : memref<16x128xf32, #tpu.memory_space<vmem>>, vector<16x128xf32>
    %7 = arith.addf %6, %5 : vector<16x128xf32>
    %c0_7 = arith.constant 0 : index
    %c0_8 = arith.constant 0 : index
    %8 = vector.load %arg5[%c0_7, %c0_8] : memref<1x128xf32, #tpu.memory_space<vmem>>, vector<1x128xf32>
    %c0_9 = arith.constant 0 : index
    %c0_10 = arith.constant 0 : index
    %9 = vector.load %arg6[%c0_9, %c0_10] : memref<1x128xf32, #tpu.memory_space<vmem>>, vector<1x128xf32>
    %cst_11 = arith.constant dense<0.000000e+00> : vector<16xf32>
    %10 = vector.multi_reduction <add>, %7, %cst_11 [1] : vector<16x128xf32> to vector<16xf32>
    %11 = vector.shape_cast %10 : vector<16xf32> to vector<16x1xf32>
    %cst_12 = arith.constant 1.280000e+02 : f32
    %12 = vector.broadcast %cst_12 : f32 to vector<16x1xf32>
    %13 = arith.divf %11, %12 : vector<16x1xf32>
    %14 = vector.broadcast %13 : vector<16x1xf32> to vector<16x128xf32>
    %15 = arith.subf %7, %14 : vector<16x128xf32>
    %16 = arith.mulf %15, %15 : vector<16x128xf32>
    %cst_13 = arith.constant dense<0.000000e+00> : vector<16xf32>
    %17 = vector.multi_reduction <add>, %16, %cst_13 [1] : vector<16x128xf32> to vector<16xf32>
    %18 = vector.shape_cast %17 : vector<16xf32> to vector<16x1xf32>
    %cst_14 = arith.constant 1.280000e+02 : f32
    %19 = vector.broadcast %cst_14 : f32 to vector<16x1xf32>
    %20 = arith.divf %18, %19 : vector<16x1xf32>
    %cst_15 = arith.constant 9.99999974E-6 : f32
    %21 = vector.broadcast %cst_15 : f32 to vector<16x1xf32>
    %22 = arith.addf %20, %21 : vector<16x1xf32>
    %23 = math.rsqrt %22 : vector<16x1xf32>
    %24 = vector.broadcast %23 : vector<16x1xf32> to vector<16x128xf32>
    %25 = arith.mulf %15, %24 : vector<16x128xf32>
    %26 = vector.broadcast %8 : vector<1x128xf32> to vector<16x128xf32>
    %27 = arith.mulf %25, %26 : vector<16x128xf32>
    %28 = vector.broadcast %9 : vector<1x128xf32> to vector<16x128xf32>
    %29 = arith.addf %27, %28 : vector<16x128xf32>
    %30 = arith.truncf %29 : vector<16x128xf32> to vector<16x128xbf16>
    %c0_16 = arith.constant 0 : index
    %c0_17 = arith.constant 0 : index
    %31 = vector.load %arg7[%c0_16, %c0_17] : memref<128x512xbf16, #tpu.memory_space<vmem>>, vector<128x512xbf16>
    %cst_18 = arith.constant dense<0.000000e+00> : vector<16x512xf32>
    %32 = tpu.matmul %30, %31, %cst_18 {dimension_numbers = #tpu.dot_dimension_numbers<[1], [0], [0], [1], [0, 0, 1, 1], [], []>} : vector<16x128xbf16>, vector<128x512xbf16>, vector<16x512xf32> -> vector<16x512xf32>
    %c0_19 = arith.constant 0 : index
    %c0_20 = arith.constant 0 : index
    %33 = vector.load %arg8[%c0_19, %c0_20] : memref<1x512xf32, #tpu.memory_space<vmem>>, vector<1x512xf32>
    %34 = vector.broadcast %33 : vector<1x512xf32> to vector<16x512xf32>
    %35 = arith.addf %32, %34 : vector<16x512xf32>
    %cst_21 = arith.constant -1.702000e+00 : f32
    %36 = vector.broadcast %cst_21 : f32 to vector<16x512xf32>
    %37 = arith.mulf %36, %35 : vector<16x512xf32>
    %38 = math.exp %37 : vector<16x512xf32>
    %cst_22 = arith.constant 1.000000e+00 : f32
    %39 = vector.broadcast %cst_22 : f32 to vector<16x512xf32>
    %40 = arith.addf %39, %38 : vector<16x512xf32>
    %41 = tpu.reciprocal %40 {approx = true} : vector<16x512xf32> -> vector<16x512xf32>
    %42 = arith.mulf %35, %41 : vector<16x512xf32>
    %43 = arith.truncf %42 : vector<16x512xf32> to vector<16x512xbf16>
    %c0_23 = arith.constant 0 : index
    %c0_24 = arith.constant 0 : index
    %44 = vector.load %arg9[%c0_23, %c0_24] : memref<512x128xbf16, #tpu.memory_space<vmem>>, vector<512x128xbf16>
    %cst_25 = arith.constant dense<0.000000e+00> : vector<16x128xf32>
    %45 = tpu.matmul %43, %44, %cst_25 {dimension_numbers = #tpu.dot_dimension_numbers<[1], [0], [0], [1], [0, 0, 1, 1], [], []>} : vector<16x512xbf16>, vector<512x128xbf16>, vector<16x128xf32> -> vector<16x128xf32>
    %c0_26 = arith.constant 0 : index
    %c0_27 = arith.constant 0 : index
    %46 = vector.load %arg10[%c0_26, %c0_27] : memref<1x128xf32, #tpu.memory_space<vmem>>, vector<1x128xf32>
    %47 = vector.broadcast %46 : vector<1x128xf32> to vector<16x128xf32>
    %48 = arith.addf %45, %47 : vector<16x128xf32>
    %49 = arith.addf %7, %48 : vector<16x128xf32>
    %c0_28 = arith.constant 0 : index
    %c0_29 = arith.constant 0 : index
    %50 = vector.load %arg11[%c0_28, %c0_29] : memref<16x128xf32, #tpu.memory_space<vmem>>, vector<16x128xf32>
    tpu.vector_store %arg11[%c0_28, %c0_29], %49 {strides = array<i32>} : memref<16x128xf32, #tpu.memory_space<vmem>>, vector<16x128xf32>,
    return
  }
  func.func @transform_0(%arg0: i32) -> (i32, i32) {
    %c0_i32 = arith.constant 0 : i32
    %c0_i32_0 = arith.constant 0 : i32
    return %arg0, %c0_i32 : i32, i32
  }
  func.func @transform_1(%arg0: i32) -> (i32, i32) {
    %c0_i32 = arith.constant 0 : i32
    %c0_i32_0 = arith.constant 0 : i32
    return %arg0, %c0_i32 : i32, i32
  }
  func.func @transform_2(%arg0: i32) -> (i32, i32) {
    %c0_i32 = arith.constant 0 : i32
    %c0_i32_0 = arith.constant 0 : i32
    %c0_i32_1 = arith.constant 0 : i32
    return %c0_i32, %c0_i32_0 : i32, i32
  }
  func.func @transform_3(%arg0: i32) -> (i32, i32) {
    %c0_i32 = arith.constant 0 : i32
    %c0_i32_0 = arith.constant 0 : i32
    %c0_i32_1 = arith.constant 0 : i32
    return %c0_i32, %c0_i32_0 : i32, i32
  }
  func.func @transform_4(%arg0: i32) -> (i32, i32) {
    %c0_i32 = arith.constant 0 : i32
    %c0_i32_0 = arith.constant 0 : i32
    %c0_i32_1 = arith.constant 0 : i32
    return %c0_i32, %c0_i32_0 : i32, i32
  }
  func.func @transform_5(%arg0: i32) -> (i32, i32) {
    %c0_i32 = arith.constant 0 : i32
    %c0_i32_0 = arith.constant 0 : i32
    %c0_i32_1 = arith.constant 0 : i32
    return %c0_i32, %c0_i32_0 : i32, i32
  }
  func.func @transform_6(%arg0: i32) -> (i32, i32) {
    %c0_i32 = arith.constant 0 : i32
    %c0_i32_0 = arith.constant 0 : i32
    %c0_i32_1 = arith.constant 0 : i32
    return %c0_i32, %c0_i32_0 : i32, i32
  }
  func.func @transform_7(%arg0: i32) -> (i32, i32) {
    %c0_i32 = arith.constant 0 : i32
    %c0_i32_0 = arith.constant 0 : i32
    %c0_i32_1 = arith.constant 0 : i32
    return %c0_i32, %c0_i32_0 : i32, i32
  }
  func.func @transform_8(%arg0: i32) -> (i32, i32) {
    %c0_i32 = arith.constant 0 : i32
    %c0_i32_0 = arith.constant 0 : i32
    %c0_i32_1 = arith.constant 0 : i32
    return %c0_i32, %c0_i32_0 : i32, i32
  }
  func.func @transform_9(%arg0: i32) -> (i32, i32) {
    %c0_i32 = arith.constant 0 : i32
    %c0_i32_0 = arith.constant 0 : i32
    %c0_i32_1 = arith.constant 0 : i32
    return %c0_i32, %c0_i32_0 : i32, i32
  }
  func.func @transform_10(%arg0: i32) -> (i32, i32) {
    %c0_i32 = arith.constant 0 : i32
    %c0_i32_0 = arith.constant 0 : i32
    return %arg0, %c0_i32 : i32, i32
  }
}

module attributes {stable_mosaic.version = 11 : i64} {
  func.func @_attn_kernel_nomask(%arg0: i32, %arg1: memref<1x8x32xbf16, #tpu.memory_space<vmem>>, %arg2: memref<1x8x32xbf16, #tpu.memory_space<vmem>>, %arg3: memref<1x8x32xbf16, #tpu.memory_space<vmem>>, %arg4: memref<1x8x32xbf16, #tpu.memory_space<vmem>>) attributes {dimension_semantics = [#tpu.dimension_semantics<parallel>], iteration_bounds = array<i64: 8>, scalar_prefetch = 0 : i64, scratch_operands = 0 : i64, tpu.core_type = #tpu.core_type<tc>, window_params = [{transform_indices = @transform_0, window_bounds = array<i64: 1, 8, 32>}, {transform_indices = @transform_1, window_bounds = array<i64: 1, 8, 32>}, {transform_indices = @transform_2, window_bounds = array<i64: 1, 8, 32>}, {transform_indices = @transform_3, window_bounds = array<i64: 1, 8, 32>}]} {
    %c0 = arith.constant 0 : index
    %c0_0 = arith.constant 0 : index
    %c0_1 = arith.constant 0 : index
    %0 = vector.load %arg1[%c0, %c0_0, %c0_1] : memref<1x8x32xbf16, #tpu.memory_space<vmem>>, vector<1x8x32xbf16>
    %1 = vector.shape_cast %0 : vector<1x8x32xbf16> to vector<8x32xbf16>
    %c0_2 = arith.constant 0 : index
    %c0_3 = arith.constant 0 : index
    %c0_4 = arith.constant 0 : index
    %2 = vector.load %arg2[%c0_2, %c0_3, %c0_4] : memref<1x8x32xbf16, #tpu.memory_space<vmem>>, vector<1x8x32xbf16>
    %3 = vector.shape_cast %2 : vector<1x8x32xbf16> to vector<8x32xbf16>
    %c0_5 = arith.constant 0 : index
    %c0_6 = arith.constant 0 : index
    %c0_7 = arith.constant 0 : index
    %4 = vector.load %arg3[%c0_5, %c0_6, %c0_7] : memref<1x8x32xbf16, #tpu.memory_space<vmem>>, vector<1x8x32xbf16>
    %5 = vector.shape_cast %4 : vector<1x8x32xbf16> to vector<8x32xbf16>
    %cst = arith.constant dense<0.000000e+00> : vector<8x8xf32>
    %6 = tpu.matmul %1, %3, %cst {dimension_numbers = #tpu.dot_dimension_numbers<[1], [1], [0], [0], [0, 0, 1, 0], [], []>} : vector<8x32xbf16>, vector<8x32xbf16>, vector<8x8xf32> -> vector<8x8xf32>
    %cst_8 = arith.constant dense<0xFF800000> : vector<8xf32>
    %7 = vector.multi_reduction <maximumf>, %6, %cst_8 [1] : vector<8x8xf32> to vector<8xf32>
    %8 = vector.shape_cast %7 : vector<8xf32> to vector<8x1xf32>
    %9 = vector.broadcast %8 : vector<8x1xf32> to vector<8x8xf32>
    %10 = arith.subf %6, %9 : vector<8x8xf32>
    %11 = math.exp %10 : vector<8x8xf32>
    %cst_9 = arith.constant dense<0.000000e+00> : vector<8xf32>
    %12 = vector.multi_reduction <add>, %11, %cst_9 [1] : vector<8x8xf32> to vector<8xf32>
    %13 = vector.shape_cast %12 : vector<8xf32> to vector<8x1xf32>
    %14 = arith.truncf %11 : vector<8x8xf32> to vector<8x8xbf16>
    %cst_10 = arith.constant dense<0.000000e+00> : vector<8x32xf32>
    %15 = tpu.matmul %14, %5, %cst_10 {dimension_numbers = #tpu.dot_dimension_numbers<[1], [0], [0], [1], [0, 0, 1, 1], [], []>} : vector<8x8xbf16>, vector<8x32xbf16>, vector<8x32xf32> -> vector<8x32xf32>
    %cst_11 = arith.constant 1.000000e-30 : f32
    %16 = vector.broadcast %cst_11 : f32 to vector<8x1xf32>
    %17 = arith.maximumf %13, %16 : vector<8x1xf32>
    %18 = tpu.reciprocal %17 {approx = true} : vector<8x1xf32> -> vector<8x1xf32>
    %19 = vector.broadcast %18 : vector<8x1xf32> to vector<8x32xf32>
    %20 = arith.mulf %15, %19 : vector<8x32xf32>
    %21 = arith.truncf %20 : vector<8x32xf32> to vector<8x32xbf16>
    %c0_12 = arith.constant 0 : index
    %c0_13 = arith.constant 0 : index
    %c0_14 = arith.constant 0 : index
    %22 = vector.load %arg4[%c0_12, %c0_13, %c0_14] : memref<1x8x32xbf16, #tpu.memory_space<vmem>>, vector<1x8x32xbf16>
    %23 = vector.shape_cast %22 : vector<1x8x32xbf16> to vector<8x32xbf16>
    %24 = vector.shape_cast %21 : vector<8x32xbf16> to vector<1x8x32xbf16>
    tpu.vector_store %arg4[%c0_12, %c0_13, %c0_14], %24 {strides = array<i32>} : memref<1x8x32xbf16, #tpu.memory_space<vmem>>, vector<1x8x32xbf16>,
    return
  }
  func.func @transform_0(%arg0: i32) -> (i32, i32, i32) {
    %c0_i32 = arith.constant 0 : i32
    %c0_i32_0 = arith.constant 0 : i32
    %c0_i32_1 = arith.constant 0 : i32
    return %arg0, %c0_i32, %c0_i32_0 : i32, i32, i32
  }
  func.func @transform_1(%arg0: i32) -> (i32, i32, i32) {
    %c0_i32 = arith.constant 0 : i32
    %c0_i32_0 = arith.constant 0 : i32
    %c0_i32_1 = arith.constant 0 : i32
    return %arg0, %c0_i32, %c0_i32_0 : i32, i32, i32
  }
  func.func @transform_2(%arg0: i32) -> (i32, i32, i32) {
    %c0_i32 = arith.constant 0 : i32
    %c0_i32_0 = arith.constant 0 : i32
    %c0_i32_1 = arith.constant 0 : i32
    return %arg0, %c0_i32, %c0_i32_0 : i32, i32, i32
  }
  func.func @transform_3(%arg0: i32) -> (i32, i32, i32) {
    %c0_i32 = arith.constant 0 : i32
    %c0_i32_0 = arith.constant 0 : i32
    %c0_i32_1 = arith.constant 0 : i32
    return %arg0, %c0_i32, %c0_i32_0 : i32, i32, i32
  }
}

</mosaic_0001>

<llo_original>
// kernel: residual_attention_block_forward.4
$region0: #{residual_attention_block_forward.4}
  #allocation0 [shape = 'u32[]', space=smem, size = 0x4, offset = 0x4, fixed_abs, tag = 'smem constant byte address 0x4 - core index']
  #allocation1 [shape = 'u32[72,128]{1,0:T(1,128)}', space=vmem, size = 0x9000, scoped, tag = 'internal scratch']
  %s0 = inlined_call_operand.vmem [shape: bf16[8,8,32], index: 0, kind: input, shape index: {}]
  %s1 = inlined_call_operand.vmem [shape: bf16[8,8,32], index: 1, kind: input, shape index: {}]
  %s2 = inlined_call_operand.vmem [shape: bf16[8,8,32], index: 2, kind: input, shape index: {}]
  %s3 = inlined_call_operand.vmem [shape: bf16[8,8,32], index: 3, kind: output, shape index: {}]
  %s4 = sld [smem:[#allocation0]]
  $region45: #{residual_attention_block_forward.4} parent=0
    _
  %s6 = ssub.s32 1, %s4
  %s7 = scalar_select 0, %s6, %s4
  loop: start=0, step=1, limit=10
  $region2: #{residual_attention_block_forward.4} parent=0 // loop_pre_header
    _
  $region3: #{residual_attention_block_forward.4} parent=0 // loop_header
    %s9 = sphi 0, %s13
    %p10 = scmp.ge.s32.totalorder %s9, 10
    %s19 = sphi 0, %s21
    %s22 = sphi 0, %s19
    %s23 = sphi 0, %s22
    %s39 = sphi 0, %s23
    %s45 = sphi 0, %s47
    %s48 = sphi 0, %s45
    %s49 = sphi 0, %s48
    %s65 = sphi 0, %s49
    %s71 = sphi 0, %s73
    %s74 = sphi 0, %s71
    %s75 = sphi 0, %s74
    %s91 = sphi 0, %s75
    %s97 = sphi 0, %s99
    %s100 = sphi 0, %s97
    %s101 = sphi 0, %s100
    %s117 = sphi 0, %s101
  $region4: #{residual_attention_block_forward.4} parent=0 // loop_header_branch
    %12 = sbr.rel (%p10) target = $region8
  $region5: #{residual_attention_block_forward.4} parent=0 // loop_body
    %s14 = ssub.s32 %s9, 1
    %s15 = ssub.s32 %s9, 2
    %s16 = sadd.s32 %s9, 1
    %s17 = ssub.s32 %s9, %s16
    %p18 = scmp.eq.s32.totalorder %s17, 0
    %s20 = sadd.s32 %s19, 1
    %s21 = scalar_select %p18, %s19, %s20
    %p24 = pneg %p18
    %p25 = scmp.eq.s32.totalorder %s9, 7
    %p26 = por %p24, %p25
    %p27 = scmp.ne.s32.totalorder %s19, %s22
    %p28 = scmp.eq.s32.totalorder %s9, 0
    %p29 = por %p27, %p28
    %p30 = scmp.ne.s32.totalorder %s19, %s22
    %p31 = scmp.eq.s32.totalorder %s14, 7
    %p32 = por %p30, %p31
    %p33 = scmp.ne.s32.totalorder %s22, %s23
    %p34 = scmp.eq.s32.totalorder %s14, 0
    %p35 = por %p33, %p34
    %p36 = scmp.ne.s32.totalorder %s22, %s23
    %p37 = scmp.eq.s32.totalorder %s15, 7
    %p38 = por %p36, %p37
    %p40 = scmp.ne.s32.totalorder %s23, %s39
    %p41 = scmp.eq.s32.totalorder %s15, 0
    %p42 = por %p40, %p41
    %s43 = ssub.s32 %s9, %s16
    %p44 = scmp.eq.s32.totalorder %s43, 0
    %s46 = sadd.s32 %s45, 1
    %s47 = scalar_select %p44, %s45, %s46
    %p50 = pneg %p44
    %p51 = scmp.eq.s32.totalorder %s9, 7
    %p52 = por %p50, %p51
    %p53 = scmp.ne.s32.totalorder %s45, %s48
    %p54 = scmp.eq.s32.totalorder %s9, 0
    %p55 = por %p53, %p54
    %p56 = scmp.ne.s32.totalorder %s45, %s48
    %p57 = scmp.eq.s32.totalorder %s14, 7
    %p58 = por %p56, %p57
    %p59 = scmp.ne.s32.totalorder %s48, %s49
    %p60 = scmp.eq.s32.totalorder %s14, 0
    %p61 = por %p59, %p60
    %p62 = scmp.ne.s32.totalorder %s48, %s49
    %p63 = scmp.eq.s32.totalorder %s15, 7
    %p64 = por %p62, %p63
    %p66 = scmp.ne.s32.totalorder %s49, %s65
    %p67 = scmp.eq.s32.totalorder %s15, 0
    %p68 = por %p66, %p67
    %s69 = ssub.s32 %s9, %s16
    %p70 = scmp.eq.s32.totalorder %s69, 0
    %s72 = sadd.s32 %s71, 1
    %s73 = scalar_select %p70, %s71, %s72
    %p76 = pneg %p70
    %p77 = scmp.eq.s32.totalorder %s9, 7
    %p78 = por %p76, %p77
    %p79 = scmp.ne.s32.totalorder %s71, %s74
    %p80 = scmp.eq.s32.totalorder %s9, 0
    %p81 = por %p79, %p80
    %p82 = scmp.ne.s32.totalorder %s71, %s74
    %p83 = scmp.eq.s32.totalorder %s14, 7
    %p84 = por %p82, %p83
    %p85 = scmp.ne.s32.totalorder %s74, %s75
    %p86 = scmp.eq.s32.totalorder %s14, 0
    %p87 = por %p85, %p86
    %p88 = scmp.ne.s32.totalorder %s74, %s75
    %p89 = scmp.eq.s32.totalorder %s15, 7
    %p90 = por %p88, %p89
    %p92 = scmp.ne.s32.totalorder %s75, %s91
    %p93 = scmp.eq.s32.totalorder %s15, 0
    %p94 = por %p92, %p93
    %s95 = ssub.s32 %s9, %s16
    %p96 = scmp.eq.s32.totalorder %s95, 0
    %s98 = sadd.s32 %s97, 1
    %s99 = scalar_select %p96, %s97, %s98
    %p102 = pneg %p96
    %p103 = scmp.eq.s32.totalorder %s9, 7
    %p104 = por %p102, %p103
    %p105 = scmp.ne.s32.totalorder %s97, %s100
    %p106 = scmp.eq.s32.totalorder %s9, 0
    %p107 = por %p105, %p106
    %p108 = scmp.ne.s32.totalorder %s97, %s100
    %p109 = scmp.eq.s32.totalorder %s14, 7
    %p110 = por %p108, %p109
    %p111 = scmp.ne.s32.totalorder %s100, %s101
    %p112 = scmp.eq.s32.totalorder %s14, 0
    %p113 = por %p111, %p112
    %p114 = scmp.ne.s32.totalorder %s100, %s101
    %p115 = scmp.eq.s32.totalorder %s15, 7
    %p116 = por %p114, %p115
    %p118 = scmp.ne.s32.totalorder %s101, %s117
    %p119 = scmp.eq.s32.totalorder %s15, 0
    %p120 = por %p118, %p119
    %p121 = scmp.le.s32.totalorder 1, %s9
    %p122 = scmp.lt.s32.totalorder %s9, 9
    %p123 = pnand %p121, %p122
    %p124 = pneg %p123
    // Predicated region
    $region9: #{residual_attention_block_forward.4} parent=5 // pred_check
      _
    $region10: #{residual_attention_block_forward.4} parent=5 // pred_check_branch
      %126 = sbr.rel (%p123) target = $region12
    $region11: #{residual_attention_block_forward.4} parent=5 // pred_region
      %s127 = ssub.s32 %s9, 1
    $region12: #{residual_attention_block_forward.4} parent=5 // pred_fallthru
      _
    %p128 = scmp.lt.s32.totalorder %s9, 8
    // Predicated region
    $region13: #{residual_attention_block_forward.4} parent=5 // pred_check
      %p129 = pneg %p128
    $region14: #{residual_attention_block_forward.4} parent=5 // pred_check_branch
      %131 = sbr.rel (%p129) target = $region16
    $region15: #{residual_attention_block_forward.4} parent=5 // pred_region
      // Predicated region
      $region17: #{residual_attention_block_forward.4} parent=15 // pred_check
        %p132 = pneg %p29
      $region18: #{residual_attention_block_forward.4} parent=15 // pred_check_branch
        %134 = sbr.rel (%p132) target = $region20
      $region19: #{residual_attention_block_forward.4} parent=15 // pred_region
        %p135 = scmp.lt.s32.totalorder %s9, 7
        %s136 = scalar_select %p135, %s9, 7
        %s137 = smul.addr %s136, 4
        %s138 = scalar_lea.vmem %s0, %s137
      $region20: #{residual_attention_block_forward.4} parent=15 // pred_fallthru
        _
      // Predicated region
      $region21: #{residual_attention_block_forward.4} parent=15 // pred_check
        %p139 = pneg %p55
      $region22: #{residual_attention_block_forward.4} parent=15 // pred_check_branch
        %141 = sbr.rel (%p139) target = $region24
      $region23: #{residual_attention_block_forward.4} parent=15 // pred_region
        %p142 = scmp.lt.s32.totalorder %s9, 7
        %s143 = scalar_select %p142, %s9, 7
        %s144 = smul.addr %s143, 4
        %s145 = scalar_lea.vmem %s1, %s144
      $region24: #{residual_attention_block_forward.4} parent=15 // pred_fallthru
        _
      // Predicated region
      $region25: #{residual_attention_block_forward.4} parent=15 // pred_check
        %p146 = pneg %p81
      $region26: #{residual_attention_block_forward.4} parent=15 // pred_check_branch
        %148 = sbr.rel (%p146) target = $region28
      $region27: #{residual_attention_block_forward.4} parent=15 // pred_region
        %p149 = scmp.lt.s32.totalorder %s9, 7
        %s150 = scalar_select %p149, %s9, 7
        %s151 = smul.addr %s150, 4
        %s152 = scalar_lea.vmem %s2, %s151
      $region28: #{residual_attention_block_forward.4} parent=15 // pred_fallthru
        _
    $region16: #{residual_attention_block_forward.4} parent=5 // pred_fallthru
      _
    %p153 = scmp.le.s32.totalorder 1, %s9
    %p154 = scmp.lt.s32.totalorder %s9, 9
    %p155 = pnand %p153, %p154
    %p156 = pneg %p155
    // Predicated region
    $region29: #{residual_attention_block_forward.4} parent=5 // pred_check
      _
    $region30: #{residual_attention_block_forward.4} parent=5 // pred_check_branch
      %158 = sbr.rel (%p155) target = $region32
    $region31: #{residual_attention_block_forward.4} parent=5 // pred_region
      %s159 = ssub.s32 %s9, 1
      %p160 = scmp.lt.s32.totalorder %s14, 7
      %s161 = scalar_select %p160, %s14, 7
      %s162 = smul.addr %s161, 4
      %s163 = scalar_lea.vmem %s0, %s162
      %p164 = pneg %p35
      %p165 = pneg %p32
      %p166 = scmp.lt.s32.totalorder %s14, 7
      %s167 = scalar_select %p166, %s14, 7
      %s168 = smul.addr %s167, 4
      %s169 = scalar_lea.vmem %s1, %s168
      %p170 = pneg %p61
      %p171 = pneg %p58
      %p172 = scmp.lt.s32.totalorder %s14, 7
      %s173 = scalar_select %p172, %s14, 7
      %s174 = smul.addr %s173, 4
      %s175 = scalar_lea.vmem %s2, %s174
      %p176 = pneg %p87
      %p177 = pneg %p84
      %p178 = pneg %p113
      %p179 = pneg %p110
      %p180 = scmp.lt.s32.totalorder %s14, 7
      %s181 = scalar_select %p180, %s14, 7
      %s182 = smul.addr %s181, 4
      %s183 = scalar_lea.vmem %s3, %s182
      %p184 = scmp.lt.s32.totalorder %s14, 7
      %s185 = scalar_select %p184, %s14, 7
      %s186 = smul.addr %s185, 4
      %s187 = scalar_lea.vmem %s0, %s186
      %p188 = scmp.lt.s32.totalorder %s14, 7
      %s189 = scalar_select %p188, %s14, 7
      %s190 = smul.addr %s189, 4
      %s191 = scalar_lea.vmem %s1, %s190
      %p192 = scmp.lt.s32.totalorder %s14, 7
      %s193 = scalar_select %p192, %s14, 7
      %s194 = smul.addr %s193, 4
      %s195 = scalar_lea.vmem %s2, %s194
      %p196 = scmp.lt.s32.totalorder %s14, 7
      %s197 = scalar_select %p196, %s14, 7
      %s198 = smul.addr %s197, 4
      %s199 = scalar_lea.vmem %s3, %s198
      %v201 = vld [vmem:[%s187] sm:$0xf]
      %v202 = vld [vmem:[%s191] sm:$0xf]
      %v203 = vld [vmem:[%s195] sm:$0xf]
      %vm204 = vcmask 261120
      %v206 = vsel %vm204, %v201, 0
      %v209 = vsel %vm204, %v202, 0
      %211 = vmatpush.bf16.xpose.msra.mxu0 0
      %212 = vmatpush.bf16.xpose.msra.mxu0 0
      %213 = vmatpush.bf16.xpose.msra.mxu0 0
      %214 = vmatpush.bf16.xpose.msra.mxu0 0
      %215 = vmatpush.bf16.xpose.msra.mxu0 0
      %216 = vmatpush.bf16.xpose.msra.mxu0 0
      %217 = vmatpush.bf16.xpose.msra.mxu0 0
      %218 = vmatpush.bf16.xpose.msra.mxu0 %v209
      %219 = vmatmul.bf16.gmra.mxu0 %v206
      %v220 = vpop.f32.mrf.mxu0
      %v221 = vadd.f32 0.0, %v220
      %v222 = vpop.f32.mrf.mxu0
      %223 = vdwg.mxu0
      %vm224 = vcmask 64512
      %v225 = vsel %vm224, %v221, -inf
      %226 = vmax.xlane.f32.xlu0 %v225
      %v227 = vpop.xlane.xlu0 %226
      %v228 = vsub.f32 %v221, %v227
      %v229 = vmul.f32 %v228, 1.442695
      %v230 = vpow.pop %v229
      %v231 = vsel %vm224, %v230, 0.0
      %232 = vadd.xlane.f32.xlu0 %v231
      %v233 = vpop.xlane.xlu0 %232
      %v234 = vpack.c.bf16 %v230, %v230
      %v236 = vsel %vm224, %v234, 0
      %vm238 = vcmask 1043456
      %v240 = vsel %vm238, %v203, 0
      %242 = vmatpush.bf16.msra.mxu0 0
      %243 = vmatpush.bf16.msra.mxu0 0
      %244 = vmatpush.bf16.msra.mxu0 0
      %245 = vmatpush.bf16.msra.mxu0 0
      %246 = vmatpush.bf16.msra.mxu0 0
      %247 = vmatpush.bf16.msra.mxu0 0
      %248 = vmatpush.bf16.msra.mxu0 0
      %249 = vmatpush.bf16.msra.mxu0 %v240
      %250 = vmatmul.bf16.gmra.mxu0 %v236
      %v251 = vpop.f32.mrf.mxu0
      %v252 = vadd.f32 0.0, %v251
      %v253 = vpop.f32.mrf.mxu0
      %254 = vdwg.mxu0
      %v255 = vmax.f32 %v233, 1e-30
      %v256 = vrcp.pop %v255
      %v257 = vmul.f32 %v252, %v256
      %v258 = vpack.c.bf16 %v257, %v257
      %vm259 = vcmask 257024
      %260 = vst.msk [vmem:[%s199] sm:$0xf] %vm259, %v258
      %p261 = scmp.lt.s32.totalorder %s14, 7
      %s262 = scalar_select %p261, %s14, 7
      %s263 = smul.addr %s262, 4
      %s264 = scalar_lea.vmem %s3, %s263
      // Predicated region
      $region33: #{residual_attention_block_forward.4} parent=31 // pred_check
        %p265 = pneg %p110
      $region34: #{residual_attention_block_forward.4} parent=31 // pred_check_branch
        %267 = sbr.rel (%p265) target = $region36
      $region35: #{residual_attention_block_forward.4} parent=31 // pred_region
        _
      $region36: #{residual_attention_block_forward.4} parent=31 // pred_fallthru
        _
    $region32: #{residual_attention_block_forward.4} parent=5 // pred_fallthru
      _
    %p268 = scmp.le.s32.totalorder 2, %s9
    // Predicated region
    $region37: #{residual_attention_block_forward.4} parent=5 // pred_check
      %p269 = pneg %p268
    $region38: #{residual_attention_block_forward.4} parent=5 // pred_check_branch
      %271 = sbr.rel (%p269) target = $region40
    $region39: #{residual_attention_block_forward.4} parent=5 // pred_region
      %s272 = ssub.s32 %s9, 2
      // Predicated region
      $region41: #{residual_attention_block_forward.4} parent=39 // pred_check
        %p273 = pneg %p116
      $region42: #{residual_attention_block_forward.4} parent=39 // pred_check_branch
        %275 = sbr.rel (%p273) target = $region44
      $region43: #{residual_attention_block_forward.4} parent=39 // pred_region
        %p276 = scmp.lt.s32.totalorder %s15, 7
        %s277 = scalar_select %p276, %s15, 7
        %s278 = smul.addr %s277, 4
        %s279 = scalar_lea.vmem %s3, %s278
      $region44: #{residual_attention_block_forward.4} parent=39 // pred_fallthru
        _
    $region40: #{residual_attention_block_forward.4} parent=5 // pred_fallthru
      _
  $region6: #{residual_attention_block_forward.4} parent=0 // loop_footer
    %s13 = sadd.s32 1, %s9
  $region7: #{residual_attention_block_forward.4} parent=0 // loop_footer_branch
    %8 = sbr.rel target = $region3
  $region8: #{residual_attention_block_forward.4} parent=0 // loop_exit
    _

// kernel: residual_attention_block_forward.3
$region0: #{residual_attention_block_forward.3}
  #allocation0 [shape = 'u32[]', space=smem, size = 0x4, offset = 0x4, fixed_abs, tag = 'smem constant byte address 0x4 - core index']
  #allocation1 [shape = 'u32[72,128]{1,0:T(1,128)}', space=vmem, size = 0x9000, scoped, tag = 'internal scratch']
  %s0 = inlined_call_operand.vmem [shape: f32[16,128], index: 0, kind: input, shape index: {}]
  %s1 = inlined_call_operand.vmem [shape: f32[1,128], index: 1, kind: input, shape index: {}]
  %s2 = inlined_call_operand.vmem [shape: f32[1,128], index: 2, kind: input, shape index: {}]
  %s3 = inlined_call_operand.hbm [shape: bf16[128,384], index: 3, kind: input, shape index: {}]
  %s4 = inlined_call_operand.vmem [shape: f32[1,384], index: 4, kind: input, shape index: {}]
  %s5 = inlined_call_operand.vmem [shape: bf16[16,384], index: 5, kind: output, shape index: {}]
  %s6 = sld [smem:[#allocation0]]
  $region34: #{residual_attention_block_forward.3} parent=0
    _
  %s8 = ssub.s32 1, %s6
  %s9 = scalar_select 0, %s8, %s6
  $region1: #{residual_attention_block_forward.3} parent=0
    #allocation2 [shape = 'u8[98304]{0}', space=vmem, size = 0x18000, scoped, tag = 'input window, operand 3, single buffered']
    #allocation3 [shape = 's32[1]{0}', space=sflag, size = 0x4, scoped, tag = 'scoped memory for residual_attention_block_forward.3']
    %10 = vsyncpa [#allocation3], 0
    // Predicated region
    $region2: #{residual_attention_block_forward.3} parent=1 // pred_check
      _
    $region3: #{residual_attention_block_forward.3} parent=1 // pred_check_branch
      %12 = sbr.rel (0) target = $region5
    $region4: #{residual_attention_block_forward.3} parent=1 // pred_region
      _
    $region5: #{residual_attention_block_forward.3} parent=1 // pred_fallthru
      _
    // Predicated region
    $region6: #{residual_attention_block_forward.3} parent=1 // pred_check
      _
    $region7: #{residual_attention_block_forward.3} parent=1 // pred_check_branch
      %14 = sbr.rel (0) target = $region9
    $region8: #{residual_attention_block_forward.3} parent=1 // pred_region
      _
    $region9: #{residual_attention_block_forward.3} parent=1 // pred_fallthru
      _
    // Predicated region
    $region10: #{residual_attention_block_forward.3} parent=1 // pred_check
      _
    $region11: #{residual_attention_block_forward.3} parent=1 // pred_check_branch
      %16 = sbr.rel (0) target = $region13
    $region12: #{residual_attention_block_forward.3} parent=1 // pred_region
      _
    $region13: #{residual_attention_block_forward.3} parent=1 // pred_fallthru
      _
    // Predicated region
    $region14: #{residual_attention_block_forward.3} parent=1 // pred_check
      _
    $region15: #{residual_attention_block_forward.3} parent=1 // pred_check_branch
      %18 = sbr.rel (0) target = $region17
    $region16: #{residual_attention_block_forward.3} parent=1 // pred_region
      %20 = vsyncadd [#allocation3], 0
      %s21 = sshll.u32 %s3, 4
      %s22 = int_to_ptr.hbm [resolvable:$true] %s21
      %s23 = sshll.u32 [#allocation2], 4
      %s24 = int_to_ptr.vmem [resolvable:$true] %s23
      %29 = dma.hbm_to_vmem [thread:$0]  %s22, 3072, %s24, [#allocation3], 192, 192, 12
    $region17: #{residual_attention_block_forward.3} parent=1 // pred_fallthru
      _
    // Predicated region
    $region18: #{residual_attention_block_forward.3} parent=1 // pred_check
      _
    $region19: #{residual_attention_block_forward.3} parent=1 // pred_check_branch
      %31 = sbr.rel (0) target = $region21
    $region20: #{residual_attention_block_forward.3} parent=1 // pred_region
      _
    $region21: #{residual_attention_block_forward.3} parent=1 // pred_fallthru
      _
    // Predicated region
    $region22: #{residual_attention_block_forward.3} parent=1 // pred_check
      _
    $region23: #{residual_attention_block_forward.3} parent=1 // pred_check_branch
      %33 = sbr.rel (0) target = $region25
    $region24: #{residual_attention_block_forward.3} parent=1 // pred_region
      %35 = dma.done [#allocation3], 3072
    $region25: #{residual_attention_block_forward.3} parent=1 // pred_fallthru
      _
    %v36 = vld [vmem:[%s0] sm:$0xff]
    %v37 = vld [vmem:[%s0 + $0x8] sm:$0xff]
    %v38 = vld [vmem:[%s1] sm:$0x1]
    %v39 = vld [vmem:[%s2] sm:$0x1]
    %40 = vadd.xlane.f32.xlu0 %v36
    %v41 = vpop.xlane.xlu0 %40
    %42 = vadd.xlane.f32.xlu0 %v37
    %v43 = vpop.xlane.xlu0 %42
    %v44 = vrcp.pop 128.0
    %v45 = vmul.f32 128.0, %v44
    %v46 = vsub.f32 1.0, %v45
    %v47 = vmul.f32 %v44, %v46
    %v48 = vadd.f32 %v44, %v47
    %vm49 = vweird.f32 %v44
    %v50 = vsel %vm49, %v44, %v48
    %v51 = vmul.f32 %v41, %v50
    %v52 = vmul.f32 %v43, %v50
    %v53 = vsub.f32 %v36, %v51
    %v54 = vsub.f32 %v37, %v52
    %v55 = vmul.f32 %v53, %v53
    %v56 = vmul.f32 %v54, %v54
    %57 = vadd.xlane.f32.xlu0 %v55
    %v58 = vpop.xlane.xlu0 %57
    %59 = vadd.xlane.f32.xlu0 %v56
    %v60 = vpop.xlane.xlu0 %59
    %v61 = vmul.f32 %v58, %v50
    %v62 = vmul.f32 %v60, %v50
    %v63 = vadd.f32 %v61, 1e-05
    %v64 = vadd.f32 %v62, 1e-05
    %v65 = vrsqrt.pop %v63
    %v66 = vmul.f32 %v65, %v63
    %v67 = vmul.f32 %v66, %v65
    %v68 = vmul.f32 0.5, %v67
    %v69 = vsub.f32 1.5, %v68
    %v70 = vmul.f32 %v65, %v69
    %vm71 = vweird.f32 %v63
    %vm72 = vweird.f32 %v65
    %vm73 = vmor %vm71, %vm72
    %v74 = vsel %vm73, %v65, %v70
    %v75 = vrsqrt.pop %v64
    %v76 = vmul.f32 %v75, %v64
    %v77 = vmul.f32 %v76, %v75
    %v78 = vmul.f32 0.5, %v77
    %v79 = vsub.f32 1.5, %v78
    %v80 = vmul.f32 %v75, %v79
    %vm81 = vweird.f32 %v64
    %vm82 = vweird.f32 %v75
    %vm83 = vmor %vm81, %vm82
    %v84 = vsel %vm83, %v75, %v80
    %v85 = vmul.f32 %v53, %v74
    %v86 = vmul.f32 %v54, %v84
    %v88 = vperm.slane %v38, 0
    %v90 = vmul.f32 %v85, %v88
    %v91 = vmul.f32 %v86, %v88
    %v93 = vperm.slane %v39, 0
    %v95 = vadd.f32 %v90, %v93
    %v96 = vadd.f32 %v91, %v93
    %v97 = vpack.c.bf16 %v96, %v95
    %v98 = vld [vmem:[#allocation2] sm:$0xff]
    %v99 = vld [vmem:[#allocation2 + $0x8] sm:$0xf]
    %v100 = vld [vmem:[#allocation2 + $0xc] sm:$0xff]
    %v101 = vld [vmem:[#allocation2 + $0x14] sm:$0xf]
    %v102 = vld [vmem:[#allocation2 + $0x18] sm:$0xff]
    %v103 = vld [vmem:[#allocation2 + $0x20] sm:$0xf]
    %v104 = vld [vmem:[#allocation2 + $0x24] sm:$0xff]
    %v105 = vld [vmem:[#allocation2 + $0x2c] sm:$0xf]
    %v106 = vld [vmem:[#allocation2 + $0x30] sm:$0xff]
    %v107 = vld [vmem:[#allocation2 + $0x38] sm:$0xf]
    %v108 = vld [vmem:[#allocation2 + $0x3c] sm:$0xff]
    %v109 = vld [vmem:[#allocation2 + $0x44] sm:$0xf]
    %v110 = vld [vmem:[#allocation2 + $0x48] sm:$0xff]
    %v111 = vld [vmem:[#allocation2 + $0x50] sm:$0xf]
    %v112 = vld [vmem:[#allocation2 + $0x54] sm:$0xff]
    %v113 = vld [vmem:[#allocation2 + $0x5c] sm:$0xf]
    %v114 = vld [vmem:[#allocation2 + $0x60] sm:$0xff]
    %v115 = vld [vmem:[#allocation2 + $0x68] sm:$0xf]
    %v116 = vld [vmem:[#allocation2 + $0x6c] sm:$0xff]
    %v117 = vld [vmem:[#allocation2 + $0x74] sm:$0xf]
    %v118 = vld [vmem:[#allocation2 + $0x78] sm:$0xff]
    %v119 = vld [vmem:[#allocation2 + $0x80] sm:$0xf]
    %v120 = vld [vmem:[#allocation2 + $0x84] sm:$0xff]
    %v121 = vld [vmem:[#allocation2 + $0x8c] sm:$0xf]
    %v122 = vld [vmem:[#allocation2 + $0x90] sm:$0xff]
    %v123 = vld [vmem:[#allocation2 + $0x98] sm:$0xf]
    %v124 = vld [vmem:[#allocation2 + $0x9c] sm:$0xff]
    %v125 = vld [vmem:[#allocation2 + $0xa4] sm:$0xf]
    %v126 = vld [vmem:[#allocation2 + $0xa8] sm:$0xff]
    %v127 = vld [vmem:[#allocation2 + $0xb0] sm:$0xf]
    %v128 = vld [vmem:[#allocation2 + $0xb4] sm:$0xff]
    %v129 = vld [vmem:[#allocation2 + $0xbc] sm:$0xf]
    %v130 = vld [vmem:[%s4] sm:$0x7]
    %v132 = vperm.slane %v130, 0
    %v133 = vperm.slane %v130, 1
    %v134 = vperm.slane %v130, 2
    %v170 = vunpack.c.l.b16 %v98
    %v171 = vunpack.c.h.b16 %v98
    %v172 = vunpack.c.l.b16 %v99
    %v173 = vunpack.c.l.b16 %v100
    %v174 = vunpack.c.h.b16 %v100
    %v175 = vunpack.c.l.b16 %v101
    %v176 = vunpack.c.l.b16 %v102
    %v177 = vunpack.c.h.b16 %v102
    %v178 = vunpack.c.l.b16 %v103
    %v179 = vunpack.c.l.b16 %v104
    %v180 = vunpack.c.h.b16 %v104
    %v181 = vunpack.c.l.b16 %v105
    %v182 = vunpack.c.l.b16 %v106
    %v183 = vunpack.c.h.b16 %v106
    %v184 = vunpack.c.l.b16 %v107
    %v185 = vunpack.c.l.b16 %v108
    %v186 = vunpack.c.h.b16 %v108
    %v187 = vunpack.c.l.b16 %v109
    %v188 = vunpack.c.l.b16 %v110
    %v189 = vunpack.c.h.b16 %v110
    %v190 = vunpack.c.l.b16 %v111
    %v191 = vunpack.c.l.b16 %v112
    %v192 = vunpack.c.h.b16 %v112
    %v193 = vunpack.c.l.b16 %v113
    %v194 = vunpack.c.l.b16 %v114
    %v195 = vunpack.c.h.b16 %v114
    %v196 = vunpack.c.l.b16 %v115
    %v197 = vunpack.c.l.b16 %v116
    %v198 = vunpack.c.h.b16 %v116
    %v199 = vunpack.c.l.b16 %v117
    %v200 = vunpack.c.l.b16 %v118
    %v201 = vunpack.c.h.b16 %v118
    %v202 = vunpack.c.l.b16 %v119
    %v203 = vunpack.c.l.b16 %v120
    %v204 = vunpack.c.h.b16 %v120
    %v205 = vunpack.c.l.b16 %v121
    %v206 = vunpack.c.l.b16 %v122
    %v207 = vunpack.c.h.b16 %v122
    %v208 = vunpack.c.l.b16 %v123
    %v209 = vunpack.c.l.b16 %v124
    %v210 = vunpack.c.h.b16 %v124
    %v211 = vunpack.c.l.b16 %v125
    %v212 = vunpack.c.l.b16 %v126
    %v213 = vunpack.c.h.b16 %v126
    %v214 = vunpack.c.l.b16 %v127
    %v215 = vunpack.c.l.b16 %v128
    %v216 = vunpack.c.h.b16 %v128
    %v217 = vunpack.c.l.b16 %v129
    %v218 = vpack.c.b16 %v173, %v170
    %v219 = vpack.c.b16 %v174, %v171
    %v220 = vpack.c.b16 %v175, %v172
    %v221 = vpack.c.b16 %v179, %v176
    %v222 = vpack.c.b16 %v180, %v177
    %v223 = vpack.c.b16 %v181, %v178
    %v224 = vpack.c.b16 %v185, %v182
    %v225 = vpack.c.b16 %v186, %v183
    %v226 = vpack.c.b16 %v187, %v184
    %v227 = vpack.c.b16 %v191, %v188
    %v228 = vpack.c.b16 %v192, %v189
    %v229 = vpack.c.b16 %v193, %v190
    %v230 = vpack.c.b16 %v197, %v194
    %v231 = vpack.c.b16 %v198, %v195
    %v232 = vpack.c.b16 %v199, %v196
    %v233 = vpack.c.b16 %v203, %v200
    %v234 = vpack.c.b16 %v204, %v201
    %v235 = vpack.c.b16 %v205, %v202
    %v236 = vpack.c.b16 %v209, %v206
    %v237 = vpack.c.b16 %v210, %v207
    %v238 = vpack.c.b16 %v211, %v208
    %v239 = vpack.c.b16 %v215, %v212
    %v240 = vpack.c.b16 %v216, %v213
    %v241 = vpack.c.b16 %v217, %v214
    %266 = vmatpush.bf16.msra.mxu0 %v239
    %267 = vmatpush.bf16.msra.mxu0 %v236
    %268 = vmatpush.bf16.msra.mxu0 %v233
    %269 = vmatpush.bf16.msra.mxu0 %v230
    %270 = vmatpush.bf16.msra.mxu0 %v227
    %271 = vmatpush.bf16.msra.mxu0 %v224
    %272 = vmatpush.bf16.msra.mxu0 %v221
    %273 = vmatpush.bf16.msra.mxu0 %v218
    %274 = vmatmul.bf16.gmra.mxu0 %v97
    %v275 = vpop.f32.mrf.mxu0
    %v276 = vadd.f32 %v132, %v275
    %v277 = vpop.f32.mrf.mxu0
    %v278 = vadd.f32 %v132, %v277
    %279 = vdwg.mxu0
    %280 = vmatpush.bf16.msra.mxu0 %v240
    %281 = vmatpush.bf16.msra.mxu0 %v237
    %282 = vmatpush.bf16.msra.mxu0 %v234
    %283 = vmatpush.bf16.msra.mxu0 %v231
    %284 = vmatpush.bf16.msra.mxu0 %v228
    %285 = vmatpush.bf16.msra.mxu0 %v225
    %286 = vmatpush.bf16.msra.mxu0 %v222
    %287 = vmatpush.bf16.msra.mxu0 %v219
    %288 = vmatmul.bf16.gmra.mxu0 %v97
    %v289 = vpop.f32.mrf.mxu0
    %v290 = vadd.f32 %v133, %v289
    %v291 = vpop.f32.mrf.mxu0
    %v292 = vadd.f32 %v133, %v291
    %293 = vdwg.mxu0
    %294 = vmatpush.bf16.msra.mxu0 %v241
    %295 = vmatpush.bf16.msra.mxu0 %v238
    %296 = vmatpush.bf16.msra.mxu0 %v235
    %297 = vmatpush.bf16.msra.mxu0 %v232
    %298 = vmatpush.bf16.msra.mxu0 %v229
    %299 = vmatpush.bf16.msra.mxu0 %v226
    %300 = vmatpush.bf16.msra.mxu0 %v223
    %301 = vmatpush.bf16.msra.mxu0 %v220
    %302 = vmatmul.bf16.gmra.mxu0 %v97
    %v303 = vpop.f32.mrf.mxu0
    %v304 = vadd.f32 %v134, %v303
    %v305 = vpop.f32.mrf.mxu0
    %v306 = vadd.f32 %v134, %v305
    %307 = vdwg.mxu0
    %v308 = vpack.c.bf16 %v290, %v276
    %v309 = vpack.c.bf16 %v304, %v304
    %v310 = vpack.c.bf16 %v292, %v278
    %v311 = vpack.c.bf16 %v306, %v306
    %312 = vst [vmem:[%s5] sm:$0xff] %v308
    %313 = vst [vmem:[%s5 + $0x8] sm:$0xf] %v309
    %314 = vst [vmem:[%s5 + $0xc] sm:$0xff] %v310
    %315 = vst [vmem:[%s5 + $0x14] sm:$0xf] %v311
    // Predicated region
    $region26: #{residual_attention_block_forward.3} parent=1 // pred_check
      _
    $region27: #{residual_attention_block_forward.3} parent=1 // pred_check_branch
      %317 = sbr.rel (0) target = $region29
    $region28: #{residual_attention_block_forward.3} parent=1 // pred_region
      _
    $region29: #{residual_attention_block_forward.3} parent=1 // pred_fallthru
      _
    // Predicated region
    $region30: #{residual_attention_block_forward.3} parent=1 // pred_check
      _
    $region31: #{residual_attention_block_forward.3} parent=1 // pred_check_branch
      %319 = sbr.rel (0) target = $region33
    $region32: #{residual_attention_block_forward.3} parent=1 // pred_region
      _
    $region33: #{residual_attention_block_forward.3} parent=1 // pred_fallthru
      _
    %320 = vsyncpa [#allocation3], 1

// kernel: residual_attention_block_forward.5
$region0: #{residual_attention_block_forward.5}
  #allocation0 [shape = 'u32[]', space=smem, size = 0x4, offset = 0x4, fixed_abs, tag = 'smem constant byte address 0x4 - core index']
  #allocation1 [shape = 'u32[72,128]{1,0:T(1,128)}', space=vmem, size = 0x9000, scoped, tag = 'internal scratch']
  %s0 = inlined_call_operand.vmem [shape: bf16[16,128], index: 0, kind: input, shape index: {}]
  %s1 = inlined_call_operand.vmem [shape: f32[16,128], index: 1, kind: input, shape index: {}]
  %s2 = inlined_call_operand.vmem [shape: bf16[128,128], index: 2, kind: input, shape index: {}]
  %s3 = inlined_call_operand.vmem [shape: f32[1,128], index: 3, kind: input, shape index: {}]
  %s4 = inlined_call_operand.vmem [shape: f32[1,128], index: 4, kind: input, shape index: {}]
  %s5 = inlined_call_operand.vmem [shape: f32[1,128], index: 5, kind: input, shape index: {}]
  %s6 = inlined_call_operand.vmem [shape: bf16[128,512], index: 6, kind: input, shape index: {}]
  %s7 = inlined_call_operand.vmem [shape: f32[1,512], index: 7, kind: input, shape index: {}]
  %s8 = inlined_call_operand.vmem [shape: bf16[512,128], index: 8, kind: input, shape index: {}]
  %s9 = inlined_call_operand.vmem [shape: f32[1,128], index: 9, kind: input, shape index: {}]
  %s10 = inlined_call_operand.vmem [shape: f32[16,128], index: 10, kind: output, shape index: {}]
  %s11 = sld [smem:[#allocation0]]
  $region50: #{residual_attention_block_forward.5} parent=0
    _
  %s13 = ssub.s32 1, %s11
  %s14 = scalar_select 0, %s13, %s11
  // Predicated region
  $region2: #{residual_attention_block_forward.5} parent=0 // pred_check
    _
  $region3: #{residual_attention_block_forward.5} parent=0 // pred_check_branch
    %16 = sbr.rel (0) target = $region5
  $region4: #{residual_attention_block_forward.5} parent=0 // pred_region
    _
  $region5: #{residual_attention_block_forward.5} parent=0 // pred_fallthru
    _
  // Predicated region
  $region6: #{residual_attention_block_forward.5} parent=0 // pred_check
    _
  $region7: #{residual_attention_block_forward.5} parent=0 // pred_check_branch
    %18 = sbr.rel (0) target = $region9
  $region8: #{residual_attention_block_forward.5} parent=0 // pred_region
    _
  $region9: #{residual_attention_block_forward.5} parent=0 // pred_fallthru
    _
  // Predicated region
  $region10: #{residual_attention_block_forward.5} parent=0 // pred_check
    _
  $region11: #{residual_attention_block_forward.5} parent=0 // pred_check_branch
    %20 = sbr.rel (0) target = $region13
  $region12: #{residual_attention_block_forward.5} parent=0 // pred_region
    _
  $region13: #{residual_attention_block_forward.5} parent=0 // pred_fallthru
    _
  // Predicated region
  $region14: #{residual_attention_block_forward.5} parent=0 // pred_check
    _
  $region15: #{residual_attention_block_forward.5} parent=0 // pred_check_branch
    %22 = sbr.rel (0) target = $region17
  $region16: #{residual_attention_block_forward.5} parent=0 // pred_region
    _
  $region17: #{residual_attention_block_forward.5} parent=0 // pred_fallthru
    _
  // Predicated region
  $region18: #{residual_attention_block_forward.5} parent=0 // pred_check
    _
  $region19: #{residual_attention_block_forward.5} parent=0 // pred_check_branch
    %24 = sbr.rel (0) target = $region21
  $region20: #{residual_attention_block_forward.5} parent=0 // pred_region
    _
  $region21: #{residual_attention_block_forward.5} parent=0 // pred_fallthru
    _
  // Predicated region
  $region22: #{residual_attention_block_forward.5} parent=0 // pred_check
    _
  $region23: #{residual_attention_block_forward.5} parent=0 // pred_check_branch
    %26 = sbr.rel (0) target = $region25
  $region24: #{residual_attention_block_forward.5} parent=0 // pred_region
    _
  $region25: #{residual_attention_block_forward.5} parent=0 // pred_fallthru
    _
  // Predicated region
  $region26: #{residual_attention_block_forward.5} parent=0 // pred_check
    _
  $region27: #{residual_attention_block_forward.5} parent=0 // pred_check_branch
    %28 = sbr.rel (0) target = $region29
  $region28: #{residual_attention_block_forward.5} parent=0 // pred_region
    _
  $region29: #{residual_attention_block_forward.5} parent=0 // pred_fallthru
    _
  // Predicated region
  $region30: #{residual_attention_block_forward.5} parent=0 // pred_check
    _
  $region31: #{residual_attention_block_forward.5} parent=0 // pred_check_branch
    %30 = sbr.rel (0) target = $region33
  $region32: #{residual_attention_block_forward.5} parent=0 // pred_region
    _
  $region33: #{residual_attention_block_forward.5} parent=0 // pred_fallthru
    _
  // Predicated region
  $region34: #{residual_attention_block_forward.5} parent=0 // pred_check
    _
  $region35: #{residual_attention_block_forward.5} parent=0 // pred_check_branch
    %32 = sbr.rel (0) target = $region37
  $region36: #{residual_attention_block_forward.5} parent=0 // pred_region
    _
  $region37: #{residual_attention_block_forward.5} parent=0 // pred_fallthru
    _
  // Predicated region
  $region38: #{residual_attention_block_forward.5} parent=0 // pred_check
    _
  $region39: #{residual_attention_block_forward.5} parent=0 // pred_check_branch
    %34 = sbr.rel (0) target = $region41
  $region40: #{residual_attention_block_forward.5} parent=0 // pred_region
    _
  $region41: #{residual_attention_block_forward.5} parent=0 // pred_fallthru
    _
  %v35 = vld [vmem:[%s0] sm:$0xf]
  %v36 = vld [vmem:[%s0 + $0x4] sm:$0xf]
  %v37 = vld [vmem:[%s2] sm:$0xf]
  %v38 = vld [vmem:[%s2 + $0x4] sm:$0xf]
  %v39 = vld [vmem:[%s2 + $0x8] sm:$0xf]
  %v40 = vld [vmem:[%s2 + $0xc] sm:$0xf]
  %v41 = vld [vmem:[%s2 + $0x10] sm:$0xf]
  %v42 = vld [vmem:[%s2 + $0x14] sm:$0xf]
  %v43 = vld [vmem:[%s2 + $0x18] sm:$0xf]
  %v44 = vld [vmem:[%s2 + $0x1c] sm:$0xf]
  %v45 = vld [vmem:[%s2 + $0x20] sm:$0xf]
  %v46 = vld [vmem:[%s2 + $0x24] sm:$0xf]
  %v47 = vld [vmem:[%s2 + $0x28] sm:$0xf]
  %v48 = vld [vmem:[%s2 + $0x2c] sm:$0xf]
  %v49 = vld [vmem:[%s2 + $0x30] sm:$0xf]
  %v50 = vld [vmem:[%s2 + $0x34] sm:$0xf]
  %v51 = vld [vmem:[%s2 + $0x38] sm:$0xf]
  %v52 = vld [vmem:[%s2 + $0x3c] sm:$0xf]
  %v53 = vld [vmem:[%s3] sm:$0x1]
  %v55 = vperm.slane %v53, 0
  %v59 = vunpack.c.l.b16 %v35
  %v60 = vunpack.c.l.b16 %v36
  %v61 = vpack.c.b16 %v60, %v59
  %v79 = vunpack.c.l.b16 %v37
  %v80 = vunpack.c.l.b16 %v38
  %v81 = vunpack.c.l.b16 %v39
  %v82 = vunpack.c.l.b16 %v40
  %v83 = vunpack.c.l.b16 %v41
  %v84 = vunpack.c.l.b16 %v42
  %v85 = vunpack.c.l.b16 %v43
  %v86 = vunpack.c.l.b16 %v44
  %v87 = vunpack.c.l.b16 %v45
  %v88 = vunpack.c.l.b16 %v46
  %v89 = vunpack.c.l.b16 %v47
  %v90 = vunpack.c.l.b16 %v48
  %v91 = vunpack.c.l.b16 %v49
  %v92 = vunpack.c.l.b16 %v50
  %v93 = vunpack.c.l.b16 %v51
  %v94 = vunpack.c.l.b16 %v52
  %v95 = vpack.c.b16 %v80, %v79
  %v96 = vpack.c.b16 %v82, %v81
  %v97 = vpack.c.b16 %v84, %v83
  %v98 = vpack.c.b16 %v86, %v85
  %v99 = vpack.c.b16 %v88, %v87
  %v100 = vpack.c.b16 %v90, %v89
  %v101 = vpack.c.b16 %v92, %v91
  %v102 = vpack.c.b16 %v94, %v93
  %111 = vmatpush.bf16.msra.mxu0 %v102
  %112 = vmatpush.bf16.msra.mxu0 %v101
  %113 = vmatpush.bf16.msra.mxu0 %v100
  %114 = vmatpush.bf16.msra.mxu0 %v99
  %115 = vmatpush.bf16.msra.mxu0 %v98
  %116 = vmatpush.bf16.msra.mxu0 %v97
  %117 = vmatpush.bf16.msra.mxu0 %v96
  %118 = vmatpush.bf16.msra.mxu0 %v95
  %119 = vmatmul.bf16.gmra.mxu0 %v61
  %v120 = vpop.f32.mrf.mxu0
  %v121 = vadd.f32 %v55, %v120
  %v122 = vpop.f32.mrf.mxu0
  %v123 = vadd.f32 %v55, %v122
  %124 = vdwg.mxu0
  %v125 = vld [vmem:[%s1] sm:$0xff]
  %v126 = vld [vmem:[%s1 + $0x8] sm:$0xff]
  %v127 = vadd.f32 %v125, %v121
  %v128 = vadd.f32 %v126, %v123
  %v129 = vld [vmem:[%s4] sm:$0x1]
  %v130 = vld [vmem:[%s5] sm:$0x1]
  %131 = vadd.xlane.f32.xlu0 %v127
  %v132 = vpop.xlane.xlu0 %131
  %133 = vadd.xlane.f32.xlu0 %v128
  %v134 = vpop.xlane.xlu0 %133
  %v135 = vrcp.pop 128.0
  %v136 = vmul.f32 128.0, %v135
  %v137 = vsub.f32 1.0, %v136
  %v138 = vmul.f32 %v135, %v137
  %v139 = vadd.f32 %v135, %v138
  %vm140 = vweird.f32 %v135
  %v141 = vsel %vm140, %v135, %v139
  %v142 = vmul.f32 %v132, %v141
  %v143 = vmul.f32 %v134, %v141
  %v144 = vsub.f32 %v127, %v142
  %v145 = vsub.f32 %v128, %v143
  %v146 = vmul.f32 %v144, %v144
  %v147 = vmul.f32 %v145, %v145
  %148 = vadd.xlane.f32.xlu0 %v146
  %v149 = vpop.xlane.xlu0 %148
  %150 = vadd.xlane.f32.xlu0 %v147
  %v151 = vpop.xlane.xlu0 %150
  %v152 = vmul.f32 %v149, %v141
  %v153 = vmul.f32 %v151, %v141
  %v154 = vadd.f32 %v152, 1e-05
  %v155 = vadd.f32 %v153, 1e-05
  %v156 = vrsqrt.pop %v154
  %v157 = vmul.f32 %v156, %v154
  %v158 = vmul.f32 %v157, %v156
  %v159 = vmul.f32 0.5, %v158
  %v160 = vsub.f32 1.5, %v159
  %v161 = vmul.f32 %v156, %v160
  %vm162 = vweird.f32 %v154
  %vm163 = vweird.f32 %v156
  %vm164 = vmor %vm162, %vm163
  %v165 = vsel %vm164, %v156, %v161
  %v166 = vrsqrt.pop %v155
  %v167 = vmul.f32 %v166, %v155
  %v168 = vmul.f32 %v167, %v166
  %v169 = vmul.f32 0.5, %v168
  %v170 = vsub.f32 1.5, %v169
  %v171 = vmul.f32 %v166, %v170
  %vm172 = vweird.f32 %v155
  %vm173 = vweird.f32 %v166
  %vm174 = vmor %vm172, %vm173
  %v175 = vsel %vm174, %v166, %v171
  %v176 = vmul.f32 %v144, %v165
  %v177 = vmul.f32 %v145, %v175
  %v179 = vperm.slane %v129, 0
  %v181 = vmul.f32 %v176, %v179
  %v182 = vmul.f32 %v177, %v179
  %v184 = vperm.slane %v130, 0
  %v186 = vadd.f32 %v181, %v184
  %v187 = vadd.f32 %v182, %v184
  %v188 = vpack.c.bf16 %v187, %v186
  %v189 = vld [vmem:[%s6] sm:$0xff]
  %v190 = vld [vmem:[%s6 + $0x8] sm:$0xff]
  %v191 = vld [vmem:[%s6 + $0x10] sm:$0xff]
  %v192 = vld [vmem:[%s6 + $0x18] sm:$0xff]
  %v193 = vld [vmem:[%s6 + $0x20] sm:$0xff]
  %v194 = vld [vmem:[%s6 + $0x28] sm:$0xff]
  %v195 = vld [vmem:[%s6 + $0x30] sm:$0xff]
  %v196 = vld [vmem:[%s6 + $0x38] sm:$0xff]
  %v197 = vld [vmem:[%s6 + $0x40] sm:$0xff]
  %v198 = vld [vmem:[%s6 + $0x48] sm:$0xff]
  %v199 = vld [vmem:[%s6 + $0x50] sm:$0xff]
  %v200 = vld [vmem:[%s6 + $0x58] sm:$0xff]
  %v201 = vld [vmem:[%s6 + $0x60] sm:$0xff]
  %v202 = vld [vmem:[%s6 + $0x68] sm:$0xff]
  %v203 = vld [vmem:[%s6 + $0x70] sm:$0xff]
  %v204 = vld [vmem:[%s6 + $0x78] sm:$0xff]
  %v205 = vld [vmem:[%s6 + $0x80] sm:$0xff]
  %v206 = vld [vmem:[%s6 + $0x88] sm:$0xff]
  %v207 = vld [vmem:[%s6 + $0x90] sm:$0xff]
  %v208 = vld [vmem:[%s6 + $0x98] sm:$0xff]
  %v209 = vld [vmem:[%s6 + $0xa0] sm:$0xff]
  %v210 = vld [vmem:[%s6 + $0xa8] sm:$0xff]
  %v211 = vld [vmem:[%s6 + $0xb0] sm:$0xff]
  %v212 = vld [vmem:[%s6 + $0xb8] sm:$0xff]
  %v213 = vld [vmem:[%s6 + $0xc0] sm:$0xff]
  %v214 = vld [vmem:[%s6 + $0xc8] sm:$0xff]
  %v215 = vld [vmem:[%s6 + $0xd0] sm:$0xff]
  %v216 = vld [vmem:[%s6 + $0xd8] sm:$0xff]
  %v217 = vld [vmem:[%s6 + $0xe0] sm:$0xff]
  %v218 = vld [vmem:[%s6 + $0xe8] sm:$0xff]
  %v219 = vld [vmem:[%s6 + $0xf0] sm:$0xff]
  %v220 = vld [vmem:[%s6 + $0xf8] sm:$0xff]
  %v221 = vld [vmem:[%s7] sm:$0xf]
  %v223 = vperm.slane %v221, 0
  %v224 = vperm.slane %v221, 1
  %v225 = vperm.slane %v221, 2
  %v226 = vperm.slane %v221, 3
  %v263 = vunpack.c.l.b16 %v189
  %v264 = vunpack.c.h.b16 %v189
  %v265 = vunpack.c.l.b16 %v190
  %v266 = vunpack.c.h.b16 %v190
  %v267 = vunpack.c.l.b16 %v191
  %v268 = vunpack.c.h.b16 %v191
  %v269 = vunpack.c.l.b16 %v192
  %v270 = vunpack.c.h.b16 %v192
  %v271 = vunpack.c.l.b16 %v193
  %v272 = vunpack.c.h.b16 %v193
  %v273 = vunpack.c.l.b16 %v194
  %v274 = vunpack.c.h.b16 %v194
  %v275 = vunpack.c.l.b16 %v195
  %v276 = vunpack.c.h.b16 %v195
  %v277 = vunpack.c.l.b16 %v196
  %v278 = vunpack.c.h.b16 %v196
  %v279 = vunpack.c.l.b16 %v197
  %v280 = vunpack.c.h.b16 %v197
  %v281 = vunpack.c.l.b16 %v198
  %v282 = vunpack.c.h.b16 %v198
  %v283 = vunpack.c.l.b16 %v199
  %v284 = vunpack.c.h.b16 %v199
  %v285 = vunpack.c.l.b16 %v200
  %v286 = vunpack.c.h.b16 %v200
  %v287 = vunpack.c.l.b16 %v201
  %v288 = vunpack.c.h.b16 %v201
  %v289 = vunpack.c.l.b16 %v202
  %v290 = vunpack.c.h.b16 %v202
  %v291 = vunpack.c.l.b16 %v203
  %v292 = vunpack.c.h.b16 %v203
  %v293 = vunpack.c.l.b16 %v204
  %v294 = vunpack.c.h.b16 %v204
  %v295 = vunpack.c.l.b16 %v205
  %v296 = vunpack.c.h.b16 %v205
  %v297 = vunpack.c.l.b16 %v206
  %v298 = vunpack.c.h.b16 %v206
  %v299 = vunpack.c.l.b16 %v207
  %v300 = vunpack.c.h.b16 %v207
  %v301 = vunpack.c.l.b16 %v208
  %v302 = vunpack.c.h.b16 %v208
  %v303 = vunpack.c.l.b16 %v209
  %v304 = vunpack.c.h.b16 %v209
  %v305 = vunpack.c.l.b16 %v210
  %v306 = vunpack.c.h.b16 %v210
  %v307 = vunpack.c.l.b16 %v211
  %v308 = vunpack.c.h.b16 %v211
  %v309 = vunpack.c.l.b16 %v212
  %v310 = vunpack.c.h.b16 %v212
  %v311 = vunpack.c.l.b16 %v213
  %v312 = vunpack.c.h.b16 %v213
  %v313 = vunpack.c.l.b16 %v214
  %v314 = vunpack.c.h.b16 %v214
  %v315 = vunpack.c.l.b16 %v215
  %v316 = vunpack.c.h.b16 %v215
  %v317 = vunpack.c.l.b16 %v216
  %v318 = vunpack.c.h.b16 %v216
  %v319 = vunpack.c.l.b16 %v217
  %v320 = vunpack.c.h.b16 %v217
  %v321 = vunpack.c.l.b16 %v218
  %v322 = vunpack.c.h.b16 %v218
  %v323 = vunpack.c.l.b16 %v219
  %v324 = vunpack.c.h.b16 %v219
  %v325 = vunpack.c.l.b16 %v220
  %v326 = vunpack.c.h.b16 %v220
  %v327 = vpack.c.b16 %v267, %v263
  %v328 = vpack.c.b16 %v268, %v264
  %v329 = vpack.c.b16 %v269, %v265
  %v330 = vpack.c.b16 %v270, %v266
  %v331 = vpack.c.b16 %v275, %v271
  %v332 = vpack.c.b16 %v276, %v272
  %v333 = vpack.c.b16 %v277, %v273
  %v334 = vpack.c.b16 %v278, %v274
  %v335 = vpack.c.b16 %v283, %v279
  %v336 = vpack.c.b16 %v284, %v280
  %v337 = vpack.c.b16 %v285, %v281
  %v338 = vpack.c.b16 %v286, %v282
  %v339 = vpack.c.b16 %v291, %v287
  %v340 = vpack.c.b16 %v292, %v288
  %v341 = vpack.c.b16 %v293, %v289
  %v342 = vpack.c.b16 %v294, %v290
  %v343 = vpack.c.b16 %v299, %v295
  %v344 = vpack.c.b16 %v300, %v296
  %v345 = vpack.c.b16 %v301, %v297
  %v346 = vpack.c.b16 %v302, %v298
  %v347 = vpack.c.b16 %v307, %v303
  %v348 = vpack.c.b16 %v308, %v304
  %v349 = vpack.c.b16 %v309, %v305
  %v350 = vpack.c.b16 %v310, %v306
  %v351 = vpack.c.b16 %v315, %v311
  %v352 = vpack.c.b16 %v316, %v312
  %v353 = vpack.c.b16 %v317, %v313
  %v354 = vpack.c.b16 %v318, %v314
  %v355 = vpack.c.b16 %v323, %v319
  %v356 = vpack.c.b16 %v324, %v320
  %v357 = vpack.c.b16 %v325, %v321
  %v358 = vpack.c.b16 %v326, %v322
  %391 = vmatpush.bf16.msra.mxu0 %v355
  %392 = vmatpush.bf16.msra.mxu0 %v351
  %393 = vmatpush.bf16.msra.mxu0 %v347
  %394 = vmatpush.bf16.msra.mxu0 %v343
  %395 = vmatpush.bf16.msra.mxu0 %v339
  %396 = vmatpush.bf16.msra.mxu0 %v335
  %397 = vmatpush.bf16.msra.mxu0 %v331
  %398 = vmatpush.bf16.msra.mxu0 %v327
  %399 = vmatmul.bf16.gmra.mxu0 %v188
  %v400 = vpop.f32.mrf.mxu0
  %v401 = vadd.f32 %v223, %v400
  %v402 = vpop.f32.mrf.mxu0
  %v403 = vadd.f32 %v223, %v402
  %404 = vdwg.mxu0
  %405 = vmatpush.bf16.msra.mxu0 %v356
  %406 = vmatpush.bf16.msra.mxu0 %v352
  %407 = vmatpush.bf16.msra.mxu0 %v348
  %408 = vmatpush.bf16.msra.mxu0 %v344
  %409 = vmatpush.bf16.msra.mxu0 %v340
  %410 = vmatpush.bf16.msra.mxu0 %v336
  %411 = vmatpush.bf16.msra.mxu0 %v332
  %412 = vmatpush.bf16.msra.mxu0 %v328
  %413 = vmatmul.bf16.gmra.mxu0 %v188
  %v414 = vpop.f32.mrf.mxu0
  %v415 = vadd.f32 %v224, %v414
  %v416 = vpop.f32.mrf.mxu0
  %v417 = vadd.f32 %v224, %v416
  %418 = vdwg.mxu0
  %419 = vmatpush.bf16.msra.mxu0 %v357
  %420 = vmatpush.bf16.msra.mxu0 %v353
  %421 = vmatpush.bf16.msra.mxu0 %v349
  %422 = vmatpush.bf16.msra.mxu0 %v345
  %423 = vmatpush.bf16.msra.mxu0 %v341
  %424 = vmatpush.bf16.msra.mxu0 %v337
  %425 = vmatpush.bf16.msra.mxu0 %v333
  %426 = vmatpush.bf16.msra.mxu0 %v329
  %427 = vmatmul.bf16.gmra.mxu0 %v188
  %v428 = vpop.f32.mrf.mxu0
  %v429 = vadd.f32 %v225, %v428
  %v430 = vpop.f32.mrf.mxu0
  %v431 = vadd.f32 %v225, %v430
  %432 = vdwg.mxu0
  %433 = vmatpush.bf16.msra.mxu0 %v358
  %434 = vmatpush.bf16.msra.mxu0 %v354
  %435 = vmatpush.bf16.msra.mxu0 %v350
  %436 = vmatpush.bf16.msra.mxu0 %v346
  %437 = vmatpush.bf16.msra.mxu0 %v342
  %438 = vmatpush.bf16.msra.mxu0 %v338
  %439 = vmatpush.bf16.msra.mxu0 %v334
  %440 = vmatpush.bf16.msra.mxu0 %v330
  %441 = vmatmul.bf16.gmra.mxu0 %v188
  %v442 = vpop.f32.mrf.mxu0
  %v443 = vadd.f32 %v226, %v442
  %v444 = vpop.f32.mrf.mxu0
  %v445 = vadd.f32 %v226, %v444
  %446 = vdwg.mxu0
  %v447 = vmul.f32 %v401, -1.702
  %v448 = vmul.f32 %v415, -1.702
  %v449 = vmul.f32 %v429, -1.702
  %v450 = vmul.f32 %v443, -1.702
  %v451 = vmul.f32 %v403, -1.702
  %v452 = vmul.f32 %v417, -1.702
  %v453 = vmul.f32 %v431, -1.702
  %v454 = vmul.f32 %v445, -1.702
  %v455 = vmul.f32 %v447, 1.442695
  %v456 = vpow.pop %v455
  %v457 = vmul.f32 %v448, 1.442695
  %v458 = vpow.pop %v457
  %v459 = vmul.f32 %v449, 1.442695
  %v460 = vpow.pop %v459
  %v461 = vmul.f32 %v450, 1.442695
  %v462 = vpow.pop %v461
  %v463 = vmul.f32 %v451, 1.442695
  %v464 = vpow.pop %v463
  %v465 = vmul.f32 %v452, 1.442695
  %v466 = vpow.pop %v465
  %v467 = vmul.f32 %v453, 1.442695
  %v468 = vpow.pop %v467
  %v469 = vmul.f32 %v454, 1.442695
  %v470 = vpow.pop %v469
  %v471 = vadd.f32 %v456, 1.0
  %v472 = vadd.f32 %v458, 1.0
  %v473 = vadd.f32 %v460, 1.0
  %v474 = vadd.f32 %v462, 1.0
  %v475 = vadd.f32 %v464, 1.0
  %v476 = vadd.f32 %v466, 1.0
  %v477 = vadd.f32 %v468, 1.0
  %v478 = vadd.f32 %v470, 1.0
  %v479 = vrcp.pop %v471
  %v480 = vrcp.pop %v472
  %v481 = vrcp.pop %v473
  %v482 = vrcp.pop %v474
  %v483 = vrcp.pop %v475
  %v484 = vrcp.pop %v476
  %v485 = vrcp.pop %v477
  %v486 = vrcp.pop %v478
  %v487 = vmul.f32 %v401, %v479
  %v488 = vmul.f32 %v415, %v480
  %v489 = vmul.f32 %v429, %v481
  %v490 = vmul.f32 %v443, %v482
  %v491 = vmul.f32 %v403, %v483
  %v492 = vmul.f32 %v417, %v484
  %v493 = vmul.f32 %v431, %v485
  %v494 = vmul.f32 %v445, %v486
  %v495 = vpack.c.bf16 %v491, %v487
  %v496 = vpack.c.bf16 %v492, %v488
  %v497 = vpack.c.bf16 %v493, %v489
  %v498 = vpack.c.bf16 %v494, %v490
  %v499 = vld [vmem:[%s8] sm:$0xf]
  %v500 = vld [vmem:[%s8 + $0x4] sm:$0xf]
  %v501 = vld [vmem:[%s8 + $0x8] sm:$0xf]
  %v502 = vld [vmem:[%s8 + $0xc] sm:$0xf]
  %v503 = vld [vmem:[%s8 + $0x10] sm:$0xf]
  %v504 = vld [vmem:[%s8 + $0x14] sm:$0xf]
  %v505 = vld [vmem:[%s8 + $0x18] sm:$0xf]
  %v506 = vld [vmem:[%s8 + $0x1c] sm:$0xf]
  %v507 = vld [vmem:[%s8 + $0x20] sm:$0xf]
  %v508 = vld [vmem:[%s8 + $0x24] sm:$0xf]
  %v509 = vld [vmem:[%s8 + $0x28] sm:$0xf]
  %v510 = vld [vmem:[%s8 + $0x2c] sm:$0xf]
  %v511 = vld [vmem:[%s8 + $0x30] sm:$0xf]
  %v512 = vld [vmem:[%s8 + $0x34] sm:$0xf]
  %v513 = vld [vmem:[%s8 + $0x38] sm:$0xf]
  %v514 = vld [vmem:[%s8 + $0x3c] sm:$0xf]
  %v515 = vld [vmem:[%s8 + $0x40] sm:$0xf]
  %v516 = vld [vmem:[%s8 + $0x44] sm:$0xf]
  %v517 = vld [vmem:[%s8 + $0x48] sm:$0xf]
  %v518 = vld [vmem:[%s8 + $0x4c] sm:$0xf]
  %v519 = vld [vmem:[%s8 + $0x50] sm:$0xf]
  %v520 = vld [vmem:[%s8 + $0x54] sm:$0xf]
  %v521 = vld [vmem:[%s8 + $0x58] sm:$0xf]
  %v522 = vld [vmem:[%s8 + $0x5c] sm:$0xf]
  %v523 = vld [vmem:[%s8 + $0x60] sm:$0xf]
  %v524 = vld [vmem:[%s8 + $0x64] sm:$0xf]
  %v525 = vld [vmem:[%s8 + $0x68] sm:$0xf]
  %v526 = vld [vmem:[%s8 + $0x6c] sm:$0xf]
  %v527 = vld [vmem:[%s8 + $0x70] sm:$0xf]
  %v528 = vld [vmem:[%s8 + $0x74] sm:$0xf]
  %v529 = vld [vmem:[%s8 + $0x78] sm:$0xf]
  %v530 = vld [vmem:[%s8 + $0x7c] sm:$0xf]
  %v531 = vld [vmem:[%s8 + $0x80] sm:$0xf]
  %v532 = vld [vmem:[%s8 + $0x84] sm:$0xf]
  %v533 = vld [vmem:[%s8 + $0x88] sm:$0xf]
  %v534 = vld [vmem:[%s8 + $0x8c] sm:$0xf]
  %v535 = vld [vmem:[%s8 + $0x90] sm:$0xf]
  %v536 = vld [vmem:[%s8 + $0x94] sm:$0xf]
  %v537 = vld [vmem:[%s8 + $0x98] sm:$0xf]
  %v538 = vld [vmem:[%s8 + $0x9c] sm:$0xf]
  %v539 = vld [vmem:[%s8 + $0xa0] sm:$0xf]
  %v540 = vld [vmem:[%s8 + $0xa4] sm:$0xf]
  %v541 = vld [vmem:[%s8 + $0xa8] sm:$0xf]
  %v542 = vld [vmem:[%s8 + $0xac] sm:$0xf]
  %v543 = vld [vmem:[%s8 + $0xb0] sm:$0xf]
  %v544 = vld [vmem:[%s8 + $0xb4] sm:$0xf]
  %v545 = vld [vmem:[%s8 + $0xb8] sm:$0xf]
  %v546 = vld [vmem:[%s8 + $0xbc] sm:$0xf]
  %v547 = vld [vmem:[%s8 + $0xc0] sm:$0xf]
  %v548 = vld [vmem:[%s8 + $0xc4] sm:$0xf]
  %v549 = vld [vmem:[%s8 + $0xc8] sm:$0xf]
  %v550 = vld [vmem:[%s8 + $0xcc] sm:$0xf]
  %v551 = vld [vmem:[%s8 + $0xd0] sm:$0xf]
  %v552 = vld [vmem:[%s8 + $0xd4] sm:$0xf]
  %v553 = vld [vmem:[%s8 + $0xd8] sm:$0xf]
  %v554 = vld [vmem:[%s8 + $0xdc] sm:$0xf]
  %v555 = vld [vmem:[%s8 + $0xe0] sm:$0xf]
  %v556 = vld [vmem:[%s8 + $0xe4] sm:$0xf]
  %v557 = vld [vmem:[%s8 + $0xe8] sm:$0xf]
  %v558 = vld [vmem:[%s8 + $0xec] sm:$0xf]
  %v559 = vld [vmem:[%s8 + $0xf0] sm:$0xf]
  %v560 = vld [vmem:[%s8 + $0xf4] sm:$0xf]
  %v561 = vld [vmem:[%s8 + $0xf8] sm:$0xf]
  %v562 = vld [vmem:[%s8 + $0xfc] sm:$0xf]
  %v563 = vld [vmem:[%s9] sm:$0x1]
  %v565 = vperm.slane %v563, 0
  %v631 = vunpack.c.l.b16 %v499
  %v632 = vunpack.c.l.b16 %v500
  %v633 = vunpack.c.l.b16 %v501
  %v634 = vunpack.c.l.b16 %v502
  %v635 = vunpack.c.l.b16 %v503
  %v636 = vunpack.c.l.b16 %v504
  %v637 = vunpack.c.l.b16 %v505
  %v638 = vunpack.c.l.b16 %v506
  %v639 = vunpack.c.l.b16 %v507
  %v640 = vunpack.c.l.b16 %v508
  %v641 = vunpack.c.l.b16 %v509
  %v642 = vunpack.c.l.b16 %v510
  %v643 = vunpack.c.l.b16 %v511
  %v644 = vunpack.c.l.b16 %v512
  %v645 = vunpack.c.l.b16 %v513
  %v646 = vunpack.c.l.b16 %v514
  %v647 = vunpack.c.l.b16 %v515
  %v648 = vunpack.c.l.b16 %v516
  %v649 = vunpack.c.l.b16 %v517
  %v650 = vunpack.c.l.b16 %v518
  %v651 = vunpack.c.l.b16 %v519
  %v652 = vunpack.c.l.b16 %v520
  %v653 = vunpack.c.l.b16 %v521
  %v654 = vunpack.c.l.b16 %v522
  %v655 = vunpack.c.l.b16 %v523
  %v656 = vunpack.c.l.b16 %v524
  %v657 = vunpack.c.l.b16 %v525
  %v658 = vunpack.c.l.b16 %v526
  %v659 = vunpack.c.l.b16 %v527
  %v660 = vunpack.c.l.b16 %v528
  %v661 = vunpack.c.l.b16 %v529
  %v662 = vunpack.c.l.b16 %v530
  %v663 = vunpack.c.l.b16 %v531
  %v664 = vunpack.c.l.b16 %v532
  %v665 = vunpack.c.l.b16 %v533
  %v666 = vunpack.c.l.b16 %v534
  %v667 = vunpack.c.l.b16 %v535
  %v668 = vunpack.c.l.b16 %v536
  %v669 = vunpack.c.l.b16 %v537
  %v670 = vunpack.c.l.b16 %v538
  %v671 = vunpack.c.l.b16 %v539
  %v672 = vunpack.c.l.b16 %v540
  %v673 = vunpack.c.l.b16 %v541
  %v674 = vunpack.c.l.b16 %v542
  %v675 = vunpack.c.l.b16 %v543
  %v676 = vunpack.c.l.b16 %v544
  %v677 = vunpack.c.l.b16 %v545
  %v678 = vunpack.c.l.b16 %v546
  %v679 = vunpack.c.l.b16 %v547
  %v680 = vunpack.c.l.b16 %v548
  %v681 = vunpack.c.l.b16 %v549
  %v682 = vunpack.c.l.b16 %v550
  %v683 = vunpack.c.l.b16 %v551
  %v684 = vunpack.c.l.b16 %v552
  %v685 = vunpack.c.l.b16 %v553
  %v686 = vunpack.c.l.b16 %v554
  %v687 = vunpack.c.l.b16 %v555
  %v688 = vunpack.c.l.b16 %v556
  %v689 = vunpack.c.l.b16 %v557
  %v690 = vunpack.c.l.b16 %v558
  %v691 = vunpack.c.l.b16 %v559
  %v692 = vunpack.c.l.b16 %v560
  %v693 = vunpack.c.l.b16 %v561
  %v694 = vunpack.c.l.b16 %v562
  %v695 = vpack.c.b16 %v632, %v631
  %v696 = vpack.c.b16 %v634, %v633
  %v697 = vpack.c.b16 %v636, %v635
  %v698 = vpack.c.b16 %v638, %v637
  %v699 = vpack.c.b16 %v640, %v639
  %v700 = vpack.c.b16 %v642, %v641
  %v701 = vpack.c.b16 %v644, %v643
  %v702 = vpack.c.b16 %v646, %v645
  %v703 = vpack.c.b16 %v648, %v647
  %v704 = vpack.c.b16 %v650, %v649
  %v705 = vpack.c.b16 %v652, %v651
  %v706 = vpack.c.b16 %v654, %v653
  %v707 = vpack.c.b16 %v656, %v655
  %v708 = vpack.c.b16 %v658, %v657
  %v709 = vpack.c.b16 %v660, %v659
  %v710 = vpack.c.b16 %v662, %v661
  %v711 = vpack.c.b16 %v664, %v663
  %v712 = vpack.c.b16 %v666, %v665
  %v713 = vpack.c.b16 %v668, %v667
  %v714 = vpack.c.b16 %v670, %v669
  %v715 = vpack.c.b16 %v672, %v671
  %v716 = vpack.c.b16 %v674, %v673
  %v717 = vpack.c.b16 %v676, %v675
  %v718 = vpack.c.b16 %v678, %v677
  %v719 = vpack.c.b16 %v680, %v679
  %v720 = vpack.c.b16 %v682, %v681
  %v721 = vpack.c.b16 %v684, %v683
  %v722 = vpack.c.b16 %v686, %v685
  %v723 = vpack.c.b16 %v688, %v687
  %v724 = vpack.c.b16 %v690, %v689
  %v725 = vpack.c.b16 %v692, %v691
  %v726 = vpack.c.b16 %v694, %v693
  %759 = vmatpush.bf16.msra.mxu0 %v702
  %760 = vmatpush.bf16.msra.mxu0 %v701
  %761 = vmatpush.bf16.msra.mxu0 %v700
  %762 = vmatpush.bf16.msra.mxu0 %v699
  %763 = vmatpush.bf16.msra.mxu0 %v698
  %764 = vmatpush.bf16.msra.mxu0 %v697
  %765 = vmatpush.bf16.msra.mxu0 %v696
  %766 = vmatpush.bf16.msra.mxu0 %v695
  %767 = vmatmul.bf16.gmra.mxu0 %v495
  %v768 = vpop.f32.mrf.mxu0
  %v769 = vadd.f32 %v565, %v768
  %v770 = vpop.f32.mrf.mxu0
  %v771 = vadd.f32 %v565, %v770
  %772 = vdwg.mxu0
  %773 = vmatpush.bf16.msra.mxu0 %v710
  %774 = vmatpush.bf16.msra.mxu0 %v709
  %775 = vmatpush.bf16.msra.mxu0 %v708
  %776 = vmatpush.bf16.msra.mxu0 %v707
  %777 = vmatpush.bf16.msra.mxu0 %v706
  %778 = vmatpush.bf16.msra.mxu0 %v705
  %779 = vmatpush.bf16.msra.mxu0 %v704
  %780 = vmatpush.bf16.msra.mxu0 %v703
  %781 = vmatmul.bf16.gmra.mxu0 %v496
  %v782 = vpop.f32.mrf.mxu0
  %v783 = vadd.f32 %v769, %v782
  %v784 = vpop.f32.mrf.mxu0
  %v785 = vadd.f32 %v771, %v784
  %786 = vdwg.mxu0
  %787 = vmatpush.bf16.msra.mxu0 %v718
  %788 = vmatpush.bf16.msra.mxu0 %v717
  %789 = vmatpush.bf16.msra.mxu0 %v716
  %790 = vmatpush.bf16.msra.mxu0 %v715
  %791 = vmatpush.bf16.msra.mxu0 %v714
  %792 = vmatpush.bf16.msra.mxu0 %v713
  %793 = vmatpush.bf16.msra.mxu0 %v712
  %794 = vmatpush.bf16.msra.mxu0 %v711
  %795 = vmatmul.bf16.gmra.mxu0 %v497
  %v796 = vpop.f32.mrf.mxu0
  %v797 = vadd.f32 %v783, %v796
  %v798 = vpop.f32.mrf.mxu0
  %v799 = vadd.f32 %v785, %v798
  %800 = vdwg.mxu0
  %801 = vmatpush.bf16.msra.mxu0 %v726
  %802 = vmatpush.bf16.msra.mxu0 %v725
  %803 = vmatpush.bf16.msra.mxu0 %v724
  %804 = vmatpush.bf16.msra.mxu0 %v723
  %805 = vmatpush.bf16.msra.mxu0 %v722
  %806 = vmatpush.bf16.msra.mxu0 %v721
  %807 = vmatpush.bf16.msra.mxu0 %v720
  %808 = vmatpush.bf16.msra.mxu0 %v719
  %809 = vmatmul.bf16.gmra.mxu0 %v498
  %v810 = vpop.f32.mrf.mxu0
  %v811 = vadd.f32 %v797, %v810
  %v812 = vpop.f32.mrf.mxu0
  %v813 = vadd.f32 %v799, %v812
  %814 = vdwg.mxu0
  %v815 = vadd.f32 %v127, %v811
  %v816 = vadd.f32 %v128, %v813
  %817 = vst [vmem:[%s10] sm:$0xff] %v815
  %818 = vst [vmem:[%s10 + $0x8] sm:$0xff] %v816
  // Predicated region
  $region42: #{residual_attention_block_forward.5} parent=0 // pred_check
    _
  $region43: #{residual_attention_block_forward.5} parent=0 // pred_check_branch
    %820 = sbr.rel (0) target = $region45
  $region44: #{residual_attention_block_forward.5} parent=0 // pred_region
    _
  $region45: #{residual_attention_block_forward.5} parent=0 // pred_fallthru
    _
  // Predicated region
  $region46: #{residual_attention_block_forward.5} parent=0 // pred_check
    _
  $region47: #{residual_attention_block_forward.5} parent=0 // pred_check_branch
    %822 = sbr.rel (0) target = $region49
  $region48: #{residual_attention_block_forward.5} parent=0 // pred_region
    _
  $region49: #{residual_attention_block_forward.5} parent=0 // pred_fallthru
    _

</llo_original>
